<compile_context>
chip_gen: v7x
topology: tpu7x:2x2x1
jax: 0.10.0
libtpu: 0.0.40
codegen_flags: <defaults>
</compile_context>

<pallas_src>
import math
import functools

import jax
import jax.numpy as jnp
from jax.experimental import pallas as pl
from jax.experimental.pallas import tpu as pltpu

MIN_NORM = 1e-15
PROJ_EPS_F32 = 4e-3  # PoincareBall.eps[torch.float32]


# ---------------------------------- small helpers ----------------------------------

def _round_up(a, b):
    return ((a + b - 1) // b) * b


def _vmem_limits():
    """Returns (scoped vmem limit, tile budget) in bytes, generation aware."""
    try:
        cap = int(pltpu.get_tpu_info().vmem_capacity_bytes)
    except Exception:
        cap = 64 * 1024 * 1024          # conservative default (v7x per-core VMEM)
    limit = min(int(cap * 0.78), 100 * 1024 * 1024)
    limit = max(limit, 32 * 1024 * 1024)
    budget = limit - 4 * 1024 * 1024    # headroom for Mosaic internal scratch
    return limit, budget


# ----------------------- math helpers (shared with the reference) -----------------------

def _artanh(z):
    z = jnp.clip(z, -1.0 + 1e-15, 1.0 - 1e-15)
    return 0.5 * (jnp.log1p(z) - jnp.log1p(-z))


def _proj(x, c):
    norm = jnp.maximum(jnp.sqrt(jnp.sum(x * x, axis=-1, keepdims=True)), MIN_NORM)
    maxnorm = (1.0 - PROJ_EPS_F32) / math.sqrt(c)
    projected = x / norm * maxnorm
    return jnp.where(norm > maxnorm, projected, x)


def _expmap0(u, c):
    sqrt_c = math.sqrt(c)
    u_norm = jnp.maximum(jnp.sqrt(jnp.sum(u * u, axis=-1, keepdims=True)), MIN_NORM)
    return jnp.tanh(sqrt_c * u_norm) * u / (sqrt_c * u_norm)


def _mobius_add(x, y, c):
    x2 = jnp.sum(x * x, axis=-1, keepdims=True)
    y2 = jnp.sum(y * y, axis=-1, keepdims=True)
    xy = jnp.sum(x * y, axis=-1, keepdims=True)
    num = (1.0 + 2.0 * c * xy + c * y2) * x + (1.0 - c * x2) * y
    denom = 1.0 + 2.0 * c * xy + c * c * x2 * y2
    return num / jnp.maximum(denom, MIN_NORM)


# ------------------------------------ Pallas kernel ------------------------------------

def _hyp_linear_kernel(x_ref, wt_ref, hb_ref, y2_ref, o_ref, *scratch,
                       c, use_bias, k_grid):
    sqrt_c = math.sqrt(c)
    maxnorm = (1.0 - PROJ_EPS_F32) / sqrt_c

    x = x_ref[...]                               # (TM, TK)  f32, zero-padded
    wt = wt_ref[...]                             # (TK, OUTP) weight.T slab (f32 or bf16)

    part = jnp.dot(x.astype(wt.dtype), wt, preferred_element_type=jnp.float32)  # (TM, OUTP)
    px2 = jnp.sum(x * x, axis=-1, keepdims=True)                                # (TM, 1)

    def finalize(mx, x2):
        # ---- mobius_matvec per-row factor, with the first proj scale folded in ----
        mx2 = jnp.sum(mx * mx, axis=-1, keepdims=True)        # (TM,1)  cross-lane reduce #1
        x_norm = jnp.maximum(jnp.sqrt(x2), MIN_NORM)
        mx_norm = jnp.maximum(jnp.sqrt(mx2), MIN_NORM)
        factor = (jnp.tanh(mx_norm * pl.reciprocal(x_norm, approx=False)
                           * _artanh(sqrt_c * x_norm))
                  * pl.reciprocal(mx_norm, approx=False) * (1.0 / sqrt_c))
        factor = jnp.where(mx2 == 0.0, 0.0, factor)           # all-zero rows -> 0

        res_norm = jnp.maximum(factor * mx_norm, MIN_NORM)    # ||res||   (factor >= 0)
        proj_scale = jnp.where(res_norm > maxnorm,
                               maxnorm * pl.reciprocal(res_norm, approx=False), 1.0)
        alpha0 = factor * proj_scale                           # proj(res) = alpha0 * mx

        if use_bias:
            hb = hb_ref[...]                                   # (1, OUTP) precomputed hyp bias
            y2 = y2_ref[0, 0]                                  # scalar ||hb||^2
            mh = jnp.sum(mx * hb, axis=-1, keepdims=True)      # (TM,1)  cross-lane reduce #2

            rnorm = jnp.minimum(res_norm, maxnorm)             # ||proj(res)||
            rx2 = rnorm * rnorm
            xy = alpha0 * mh                                   # <proj(res), hb>
            two_cxy = 2.0 * c * xy
            a_num = 1.0 + two_cxy + c * y2
            b_num = 1.0 - c * rx2
            inv_d = pl.reciprocal(
                jnp.maximum(1.0 + two_cxy + (c * c * y2) * rx2, MIN_NORM), approx=False)
            alpha = alpha0 * a_num * inv_d
            beta = b_num * inv_d

            # ||alpha*mx + beta*hb||^2 analytically (no full-width reduce over the output)
            out2 = jnp.maximum(alpha * alpha * mx2 + 2.0 * (alpha * beta) * mh
                               + (beta * beta) * y2, 0.0)
            out_norm = jnp.maximum(jnp.sqrt(out2), MIN_NORM)
            s = jnp.where(out_norm > maxnorm,
                          maxnorm * pl.reciprocal(out_norm, approx=False), 1.0)
            o_ref[...] = ((s * alpha) * mx + (s * beta) * hb).astype(o_ref.dtype)
        else:
            o_ref[...] = (alpha0 * mx).astype(o_ref.dtype)

    if k_grid == 1:
        finalize(part, px2)
    else:
        acc_ref, x2_ref = scratch
        k = pl.program_id(1)

        @pl.when(k == 0)
        def _():
            acc_ref[...] = jnp.zeros_like(acc_ref)
            x2_ref[...] = jnp.zeros_like(x2_ref)

        acc_ref[...] += part
        x2_ref[...] += px2

        @pl.when(k == k_grid - 1)
        def _():
            finalize(acc_ref[...], x2_ref[...])


# ----------------------------------- host wrappers -----------------------------------

def prepare_hyp_linear_params(weight, bias, c, use_bias=True, matmul_dtype=None):
    """One-time parameter prep (hoisted out of the per-call path): pads/transposes the weight
    and computes the hyperbolic bias proj(expmap0(proj_tan0(bias), c), c) and its squared norm.

    matmul_dtype: optionally jnp.bfloat16 to run the MXU in bf16 (higher matmul throughput,
    half the weight VMEM/HBM footprint) at ~1e-3 accuracy.
    """
    out_f, in_f = weight.shape
    inp = _round_up(in_f, 128)
    outp = _round_up(out_f, 128)
    f32 = jnp.float32
    wtp = jnp.pad(weight.astype(f32).T, ((0, inp - in_f), (0, outp - out_f)))
    if matmul_dtype is not None:
        wtp = wtp.astype(matmul_dtype)
    if use_bias:
        hb = _proj(_expmap0(bias.reshape(1, -1).astype(f32), float(c)), float(c))
        hbp = jnp.pad(hb, ((0, 0), (0, outp - out_f)))
    else:
        hbp = jnp.zeros((1, outp), f32)
    y2 = jnp.sum(hbp * hbp, axis=-1, keepdims=True)    # (1,1), grid-invariant
    return dict(wtp=wtp, hbp=hbp, y2=y2, in_features=in_f, out_features=out_f,
                c=float(c), use_bias=bool(use_bias))


def hyp_linear_apply(x, params, *, tm=None, tk=None, force_k_tiling=False):
    wtp, hbp, y2 = params["wtp"], params["hbp"], params["y2"]
    in_f, out_f = params["in_features"], params["out_features"]
    c, use_bias = params["c"], params["use_bias"]
    inp, outp = wtp.shape
    n = x.shape[0]
    assert x.shape[1] == in_f

    f32 = jnp.float32
    n_pad = _round_up(max(n, 1), 8)                    # rows padded only to sublane (not tm)
    xp = jnp.pad(x.astype(f32), ((0, n_pad - n), (0, inp - in_f)))

    vmem_limit, budget = _vmem_limits()
    w_bytes = int(wtp.dtype.itemsize)

    # ---- row tile ----
    if tm is None:
        tm = 512 if vmem_limit >= 80 * 1024 * 1024 else 256
    tm = max(8, min(_round_up(tm, 8), n_pad))
    if n_pad >= 16 and pl.cdiv(n_pad, tm) < 2:
        # keep >= 2 row blocks so both TensorCores (v7x) get work for small batches
        tm = max(8, _round_up(pl.cdiv(n_pad, 2), 8))

    def single_k_bytes(t):
        # x tile (double-buffered) + out tile (double-buffered)
        # + resident weight (Buffered(1)) + hyperbolic bias (Buffered(1))
        return 4 * 2 * t * inp + 4 * 2 * t * outp + w_bytes * inp * outp + 4 * outp

    k_tiling = bool(force_k_tiling) or (w_bytes * inp * outp > int(0.6 * budget))
    if not k_tiling:
        min_tm = min(128, tm)
        while tm > min_tm and single_k_bytes(tm) > budget:
            tm = max(min_tm, ((tm // 2) // 8) * 8)
        if single_k_bytes(tm) > budget:
            k_tiling = True    # don't collapse tm below 128; tile the reduction instead

    if k_tiling:
        tk_target = tk if tk is not None else 512
        tk_target = max(128, _round_up(tk_target, 128))

        def k_bytes(t, kk):
            # x + weight K-slab double-buffered, out double-buffered, acc/x2 scratch, hb
            return (4 * 2 * t * kk + w_bytes * 2 * kk * outp + 4 * 2 * t * outp
                    + 4 * t * outp + 4 * t + 4 * outp)

        # tk must divide inp exactly (a partial K block would pollute the accumulator)
        m = inp // 128
        tk_sel = 128
        for d in range(1, m + 1):
            cand = 128 * d
            if m % d == 0 and cand <= tk_target and k_bytes(tm, cand) <= budget:
                tk_sel = max(tk_sel, cand)
        tk = tk_sel
        while tm > 8 and k_bytes(tm, tk) > budget:
            tm = max(8, ((tm // 2) // 8) * 8)
        k_grid = inp // tk
    else:
        tk = inp
        k_grid = 1

    rows_grid = int(pl.cdiv(n_pad, tm))
    grid = (rows_grid, int(k_grid))

    kernel = functools.partial(_hyp_linear_kernel, c=c, use_bias=use_bias, k_grid=int(k_grid))

    if k_grid == 1:
        scratch_shapes = []
    else:
        scratch_shapes = [pltpu.VMEM((tm, outp), jnp.float32),
                          pltpu.VMEM((tm, 1), jnp.float32)]

    w_reads = 1 if k_grid == 1 else rows_grid
    cost = pl.CostEstimate(
        flops=2 * n_pad * inp * outp,
        transcendentals=8 * n_pad,
        bytes_accessed=4 * n_pad * inp + w_bytes * inp * outp * w_reads + 4 * n_pad * outp,
    )

    def _call(buffered_consts):
        wt_kwargs, hb_kwargs = {}, {}
        if buffered_consts:
            hb_kwargs = dict(pipeline_mode=pl.Buffered(1))
            if k_grid == 1:
                wt_kwargs = dict(pipeline_mode=pl.Buffered(1))
        grid_spec = pltpu.PrefetchScalarGridSpec(
            num_scalar_prefetch=0,
            grid=grid,
            in_specs=[
                pl.BlockSpec((tm, tk), lambda i, k: (i, k)),                  # x row/K tile
                pl.BlockSpec((tk, outp), lambda i, k: (k, 0), **wt_kwargs),   # weight.T slab
                pl.BlockSpec((1, outp), lambda i, k: (0, 0), **hb_kwargs),    # hyperbolic bias
                pl.BlockSpec(memory_space=pltpu.MemorySpace.SMEM),            # y2 scalar
            ],
            out_specs=pl.BlockSpec((tm, outp), lambda i, k: (i, 0)),
            scratch_shapes=scratch_shapes,
        )
        out = pl.pallas_call(
            kernel,
            out_shape=jax.ShapeDtypeStruct((n_pad, outp), x.dtype),
            grid_spec=grid_spec,
            compiler_params=pltpu.CompilerParams(
                dimension_semantics=("parallel", "arbitrary"),
                vmem_limit_bytes=int(vmem_limit),
            ),
            cost_estimate=cost,
        )(xp, wtp, hbp, y2)
        return jax.block_until_ready(out)

    try:
        out = _call(True)
    except Exception:
        # pipeline_mode=pl.Buffered(1) not accepted on this jax version -> plain specs.
        out = _call(False)

    return out[:n, :out_f]


def hyp_linear(x, weight, bias, c, use_bias=True, **kwargs):
    """Convenience wrapper (prepare + apply). For repeated inference, call
    prepare_hyp_linear_params once and reuse it with hyp_linear_apply."""
    return hyp_linear_apply(x, prepare_hyp_linear_params(weight, bias, c, use_bias), **kwargs)


# ----------------------------------- pure-JAX reference -----------------------------------

def hyp_linear_ref(x, weight, bias, c, use_bias=True):
    sqrt_c = math.sqrt(c)
    mx = x @ weight.T
    x_norm = jnp.maximum(jnp.linalg.norm(x, axis=-1, keepdims=True), MIN_NORM)
    mx_norm = jnp.maximum(jnp.linalg.norm(mx, axis=-1, keepdims=True), MIN_NORM)
    res_c = jnp.tanh(mx_norm / x_norm * _artanh(sqrt_c * x_norm)) * mx / (mx_norm * sqrt_c)
    cond = jnp.all(mx == 0, axis=-1, keepdims=True)
    res = jnp.where(cond, jnp.zeros_like(res_c), res_c)
    res = _proj(res, c)
    if use_bias:
        hyp_bias = _proj(_expmap0(bias.reshape(1, -1), c), c)
        res = _proj(_mobius_add(res, hyp_bias, c), c)
    return res


# -------------------------------------------- main --------------------------------------------

if __name__ == "__main__":
    key = jax.random.PRNGKey(0)
    C = 1.0
    k_w, k_b, k_x, k_w2, k_b2, k_x2 = jax.random.split(key, 6)

    # --- check 1: small layer, resident-weight (single-K) path ---
    N, IN_F, OUT_F = 16, 32, 32
    bound = math.sqrt(2.0) * math.sqrt(6.0 / (IN_F + OUT_F))   # xavier_uniform_, gain=sqrt(2)
    weight = jax.random.uniform(k_w, (OUT_F, IN_F), jnp.float32, -bound, bound)
    # Module inits bias to 0; use a small nonzero bias to exercise the hyperbolic bias path.
    bias = jax.random.uniform(k_b, (OUT_F,), jnp.float32, -0.1, 0.1)
    # Inputs to HypLinear are points on the Poincare ball: map random tangents via expmap0+proj.
    u = 0.5 * jax.random.normal(k_x, (N, IN_F), jnp.float32)
    x = _proj(_expmap0(u, C), C)

    params = prepare_hyp_linear_params(weight, bias, C, use_bias=True)
    out = jax.block_until_ready(hyp_linear_apply(x, params))
    ref = hyp_linear_ref(x, weight, bias, C, use_bias=True)
    assert out.shape == (N, OUT_F)
    assert jnp.allclose(out, ref, rtol=1e-5, atol=1e-5), (
        f"single-K path: max abs diff {jnp.max(jnp.abs(out - ref))}")

    # --- check 2: K-tiled accumulator path (forced, modest shapes) ---
    N2, IN2, OUT2 = 24, 384, 96
    bound2 = math.sqrt(2.0) * math.sqrt(6.0 / (IN2 + OUT2))
    weight2 = jax.random.uniform(k_w2, (OUT2, IN2), jnp.float32, -bound2, bound2)
    bias2 = jax.random.uniform(k_b2, (OUT2,), jnp.float32, -0.1, 0.1)
    u2 = 0.1 * jax.random.normal(k_x2, (N2, IN2), jnp.float32)
    x2 = _proj(_expmap0(u2, C), C)

    params2 = prepare_hyp_linear_params(weight2, bias2, C, use_bias=True)
    out2 = jax.block_until_ready(
        hyp_linear_apply(x2, params2, tm=8, tk=128, force_k_tiling=True))
    ref2 = hyp_linear_ref(x2, weight2, bias2, C, use_bias=True)
    assert out2.shape == (N2, OUT2)
    assert jnp.allclose(out2, ref2, rtol=1e-5, atol=1e-5), (
        f"K-tiled path: max abs diff {jnp.max(jnp.abs(out2 - ref2))}")

    print("KERNEL_OK")
</pallas_src>

<mosaic_0001>
module attributes {stable_mosaic.version = 11 : i64} {
  func.func @_hyp_linear_kernel(%arg0: i32, %arg1: i32, %arg2: memref<8x128xf32, #tpu.memory_space<vmem>>, %arg3: memref<128x128xf32, #tpu.memory_space<vmem>>, %arg4: memref<1x128xf32, #tpu.memory_space<vmem>>, %arg5: memref<1x1xf32, #tpu.memory_space<smem>>, %arg6: memref<8x128xf32, #tpu.memory_space<vmem>>) attributes {dimension_semantics = [#tpu.dimension_semantics<parallel>, #tpu.dimension_semantics<arbitrary>], iteration_bounds = array<i64: 2, 1>, scalar_prefetch = 0 : i64, scratch_operands = 0 : i64, tpu.core_type = #tpu.core_type<tc>, window_params = [{transform_indices = @transform_0, window_bounds = array<i64: 8, 128>}, {pipeline_mode = #tpu.pipeline_mode<synchronous>, transform_indices = @transform_1, window_bounds = array<i64: 128, 128>}, {pipeline_mode = #tpu.pipeline_mode<synchronous>, transform_indices = @transform_2, window_bounds = array<i64: 1, 128>}, {transform_indices = @transform_3, window_bounds = array<i64: 1, 1>}, {transform_indices = @transform_4, window_bounds = array<i64: 8, 128>}]} {
    %c0 = arith.constant 0 : index
    %c0_0 = arith.constant 0 : index
    %0 = vector.load %arg2[%c0, %c0_0] : memref<8x128xf32, #tpu.memory_space<vmem>>, vector<8x128xf32>
    %c0_1 = arith.constant 0 : index
    %c0_2 = arith.constant 0 : index
    %1 = vector.load %arg3[%c0_1, %c0_2] : memref<128x128xf32, #tpu.memory_space<vmem>>, vector<128x128xf32>
    %cst = arith.constant dense<0.000000e+00> : vector<8x128xf32>
    %2 = tpu.matmul %0, %1, %cst {dimension_numbers = #tpu.dot_dimension_numbers<[1], [0], [0], [1], [0, 0, 1, 1], [], []>} : vector<8x128xf32>, vector<128x128xf32>, vector<8x128xf32> -> vector<8x128xf32>
    %3 = arith.mulf %0, %0 : vector<8x128xf32>
    %cst_3 = arith.constant dense<0.000000e+00> : vector<8xf32>
    %4 = vector.multi_reduction <add>, %3, %cst_3 [1] : vector<8x128xf32> to vector<8xf32>
    %5 = vector.shape_cast %4 : vector<8xf32> to vector<8x1xf32>
    %6 = arith.mulf %2, %2 : vector<8x128xf32>
    %cst_4 = arith.constant dense<0.000000e+00> : vector<8xf32>
    %7 = vector.multi_reduction <add>, %6, %cst_4 [1] : vector<8x128xf32> to vector<8xf32>
    %8 = vector.shape_cast %7 : vector<8xf32> to vector<8x1xf32>
    %9 = math.sqrt %5 : vector<8x1xf32>
    %cst_5 = arith.constant 1.000000e-15 : f32
    %10 = vector.broadcast %cst_5 : f32 to vector<8x1xf32>
    %11 = arith.maximumf %9, %10 : vector<8x1xf32>
    %12 = math.sqrt %8 : vector<8x1xf32>
    %cst_6 = arith.constant 1.000000e-15 : f32
    %13 = vector.broadcast %cst_6 : f32 to vector<8x1xf32>
    %14 = arith.maximumf %12, %13 : vector<8x1xf32>
    %15 = tpu.reciprocal %11 : vector<8x1xf32> -> vector<8x1xf32>
    %16 = arith.mulf %14, %15 : vector<8x1xf32>
    %cst_7 = arith.constant 1.000000e+00 : f32
    %17 = vector.broadcast %cst_7 : f32 to vector<8x1xf32>
    %18 = arith.mulf %17, %11 : vector<8x1xf32>
    %cst_8 = arith.constant -1.000000e+00 : f32
    %cst_9 = arith.constant 1.000000e+00 : f32
    %19 = vector.broadcast %cst_8 : f32 to vector<8x1xf32>
    %20 = arith.maximumf %19, %18 : vector<8x1xf32>
    %21 = vector.broadcast %cst_9 : f32 to vector<8x1xf32>
    %22 = arith.minimumf %21, %20 : vector<8x1xf32>
    %23 = math.log1p %22 : vector<8x1xf32>
    %cst_10 = arith.constant 0.000000e+00 : f32
    %24 = vector.broadcast %cst_10 : f32 to vector<8x1xf32>
    %25 = arith.subf %24, %22 : vector<8x1xf32>
    %26 = math.log1p %25 : vector<8x1xf32>
    %27 = arith.subf %23, %26 : vector<8x1xf32>
    %cst_11 = arith.constant 5.000000e-01 : f32
    %28 = vector.broadcast %cst_11 : f32 to vector<8x1xf32>
    %29 = arith.mulf %28, %27 : vector<8x1xf32>
    %30 = arith.mulf %16, %29 : vector<8x1xf32>
    %31 = math.tanh %30 : vector<8x1xf32>
    %32 = tpu.reciprocal %14 : vector<8x1xf32> -> vector<8x1xf32>
    %33 = arith.mulf %31, %32 : vector<8x1xf32>
    %cst_12 = arith.constant 1.000000e+00 : f32
    %34 = vector.broadcast %cst_12 : f32 to vector<8x1xf32>
    %35 = arith.mulf %33, %34 : vector<8x1xf32>
    %cst_13 = arith.constant 0.000000e+00 : f32
    %36 = vector.broadcast %cst_13 : f32 to vector<8x1xf32>
    %37 = arith.cmpf oeq, %8, %36 : vector<8x1xf32>
    %cst_14 = arith.constant 0.000000e+00 : f32
    %38 = vector.broadcast %cst_14 : f32 to vector<8x1xf32>
    %39 = arith.select %37, %38, %35 : vector<8x1xi1>, vector<8x1xf32>
    %40 = arith.mulf %39, %14 : vector<8x1xf32>
    %cst_15 = arith.constant 1.000000e-15 : f32
    %41 = vector.broadcast %cst_15 : f32 to vector<8x1xf32>
    %42 = arith.maximumf %40, %41 : vector<8x1xf32>
    %cst_16 = arith.constant 0.995999991 : f32
    %43 = vector.broadcast %cst_16 : f32 to vector<8x1xf32>
    %44 = arith.cmpf ogt, %42, %43 : vector<8x1xf32>
    %45 = tpu.reciprocal %42 : vector<8x1xf32> -> vector<8x1xf32>
    %cst_17 = arith.constant 0.995999991 : f32
    %46 = vector.broadcast %cst_17 : f32 to vector<8x1xf32>
    %47 = arith.mulf %46, %45 : vector<8x1xf32>
    %cst_18 = arith.constant 1.000000e+00 : f32
    %48 = vector.broadcast %cst_18 : f32 to vector<8x1xf32>
    %49 = arith.select %44, %47, %48 : vector<8x1xi1>, vector<8x1xf32>
    %50 = arith.mulf %39, %49 : vector<8x1xf32>
    %c0_19 = arith.constant 0 : index
    %c0_20 = arith.constant 0 : index
    %51 = vector.load %arg4[%c0_19, %c0_20] : memref<1x128xf32, #tpu.memory_space<vmem>>, vector<1x128xf32>
    %c0_21 = arith.constant 0 : index
    %c0_22 = arith.constant 0 : index
    %52 = memref.load %arg5[%c0_21, %c0_22] : memref<1x1xf32, #tpu.memory_space<smem>>
    %53 = vector.broadcast %51 : vector<1x128xf32> to vector<8x128xf32>
    %54 = arith.mulf %2, %53 : vector<8x128xf32>
    %cst_23 = arith.constant dense<0.000000e+00> : vector<8xf32>
    %55 = vector.multi_reduction <add>, %54, %cst_23 [1] : vector<8x128xf32> to vector<8xf32>
    %56 = vector.shape_cast %55 : vector<8xf32> to vector<8x1xf32>
    %cst_24 = arith.constant 0.995999991 : f32
    %57 = vector.broadcast %cst_24 : f32 to vector<8x1xf32>
    %58 = arith.minimumf %42, %57 : vector<8x1xf32>
    %59 = arith.mulf %58, %58 : vector<8x1xf32>
    %60 = arith.mulf %50, %56 : vector<8x1xf32>
    %cst_25 = arith.constant 2.000000e+00 : f32
    %61 = vector.broadcast %cst_25 : f32 to vector<8x1xf32>
    %62 = arith.mulf %61, %60 : vector<8x1xf32>
    %cst_26 = arith.constant 1.000000e+00 : f32
    %63 = vector.broadcast %cst_26 : f32 to vector<8x1xf32>
    %64 = arith.addf %63, %62 : vector<8x1xf32>
    %cst_27 = arith.constant 1.000000e+00 : f32
    %65 = arith.mulf %cst_27, %52 : f32
    %66 = vector.broadcast %65 : f32 to vector<8x1xf32>
    %67 = arith.addf %64, %66 : vector<8x1xf32>
    %cst_28 = arith.constant 1.000000e+00 : f32
    %68 = vector.broadcast %cst_28 : f32 to vector<8x1xf32>
    %69 = arith.mulf %68, %59 : vector<8x1xf32>
    %cst_29 = arith.constant 1.000000e+00 : f32
    %70 = vector.broadcast %cst_29 : f32 to vector<8x1xf32>
    %71 = arith.subf %70, %69 : vector<8x1xf32>
    %cst_30 = arith.constant 1.000000e+00 : f32
    %72 = vector.broadcast %cst_30 : f32 to vector<8x1xf32>
    %73 = arith.addf %72, %62 : vector<8x1xf32>
    %cst_31 = arith.constant 1.000000e+00 : f32
    %74 = arith.mulf %cst_31, %52 : f32
    %75 = vector.broadcast %74 : f32 to vector<8x1xf32>
    %76 = arith.mulf %75, %59 : vector<8x1xf32>
    %77 = arith.addf %73, %76 : vector<8x1xf32>
    %cst_32 = arith.constant 1.000000e-15 : f32
    %78 = vector.broadcast %cst_32 : f32 to vector<8x1xf32>
    %79 = arith.maximumf %77, %78 : vector<8x1xf32>
    %80 = tpu.reciprocal %79 : vector<8x1xf32> -> vector<8x1xf32>
    %81 = arith.mulf %50, %67 : vector<8x1xf32>
    %82 = arith.mulf %81, %80 : vector<8x1xf32>
    %83 = arith.mulf %71, %80 : vector<8x1xf32>
    %84 = arith.mulf %82, %82 : vector<8x1xf32>
    %85 = arith.mulf %84, %8 : vector<8x1xf32>
    %86 = arith.mulf %82, %83 : vector<8x1xf32>
    %cst_33 = arith.constant 2.000000e+00 : f32
    %87 = vector.broadcast %cst_33 : f32 to vector<8x1xf32>
    %88 = arith.mulf %87, %86 : vector<8x1xf32>
    %89 = arith.mulf %88, %56 : vector<8x1xf32>
    %90 = arith.addf %85, %89 : vector<8x1xf32>
    %91 = arith.mulf %83, %83 : vector<8x1xf32>
    %92 = vector.broadcast %52 : f32 to vector<8x1xf32>
    %93 = arith.mulf %91, %92 : vector<8x1xf32>
    %94 = arith.addf %90, %93 : vector<8x1xf32>
    %cst_34 = arith.constant 0.000000e+00 : f32
    %95 = vector.broadcast %cst_34 : f32 to vector<8x1xf32>
    %96 = arith.maximumf %94, %95 : vector<8x1xf32>
    %97 = math.sqrt %96 : vector<8x1xf32>
    %cst_35 = arith.constant 1.000000e-15 : f32
    %98 = vector.broadcast %cst_35 : f32 to vector<8x1xf32>
    %99 = arith.maximumf %97, %98 : vector<8x1xf32>
    %cst_36 = arith.constant 0.995999991 : f32
    %100 = vector.broadcast %cst_36 : f32 to vector<8x1xf32>
    %101 = arith.cmpf ogt, %99, %100 : vector<8x1xf32>
    %102 = tpu.reciprocal %99 : vector<8x1xf32> -> vector<8x1xf32>
    %cst_37 = arith.constant 0.995999991 : f32
    %103 = vector.broadcast %cst_37 : f32 to vector<8x1xf32>
    %104 = arith.mulf %103, %102 : vector<8x1xf32>
    %cst_38 = arith.constant 1.000000e+00 : f32
    %105 = vector.broadcast %cst_38 : f32 to vector<8x1xf32>
    %106 = arith.select %101, %104, %105 : vector<8x1xi1>, vector<8x1xf32>
    %107 = arith.mulf %106, %82 : vector<8x1xf32>
    %108 = vector.broadcast %107 : vector<8x1xf32> to vector<8x128xf32>
    %109 = arith.mulf %108, %2 : vector<8x128xf32>
    %110 = arith.mulf %106, %83 : vector<8x1xf32>
    %111 = vector.broadcast %110 : vector<8x1xf32> to vector<8x128xf32>
    %112 = vector.broadcast %51 : vector<1x128xf32> to vector<8x128xf32>
    %113 = arith.mulf %111, %112 : vector<8x128xf32>
    %114 = arith.addf %109, %113 : vector<8x128xf32>
    %c0_39 = arith.constant 0 : index
    %c0_40 = arith.constant 0 : index
    %115 = vector.load %arg6[%c0_39, %c0_40] : memref<8x128xf32, #tpu.memory_space<vmem>>, vector<8x128xf32>
    tpu.vector_store %arg6[%c0_39, %c0_40], %114 {strides = array<i32>} : memref<8x128xf32, #tpu.memory_space<vmem>>, vector<8x128xf32>,
    return
  }
  func.func @transform_0(%arg0: i32, %arg1: i32) -> (i32, i32) {
    %c0_i32 = arith.constant 0 : i32
    return %arg0, %arg1 : i32, i32
  }
  func.func @transform_1(%arg0: i32, %arg1: i32) -> (i32, i32) {
    %c0_i32 = arith.constant 0 : i32
    %c0_i32_0 = arith.constant 0 : i32
    return %arg1, %c0_i32 : i32, i32
  }
  func.func @transform_2(%arg0: i32, %arg1: i32) -> (i32, i32) {
    %c0_i32 = arith.constant 0 : i32
    %c0_i32_0 = arith.constant 0 : i32
    %c0_i32_1 = arith.constant 0 : i32
    return %c0_i32, %c0_i32_0 : i32, i32
  }
  func.func @transform_3(%arg0: i32, %arg1: i32) -> (i32, i32) {
    %c0_i32 = arith.constant 0 : i32
    %c0_i32_0 = arith.constant 0 : i32
    %c0_i32_1 = arith.constant 0 : i32
    return %c0_i32, %c0_i32_0 : i32, i32
  }
  func.func @transform_4(%arg0: i32, %arg1: i32) -> (i32, i32) {
    %c0_i32 = arith.constant 0 : i32
    %c0_i32_0 = arith.constant 0 : i32
    return %arg0, %c0_i32 : i32, i32
  }
}

module attributes {stable_mosaic.version = 11 : i64} {
  func.func @_hyp_linear_kernel(%arg0: i32, %arg1: i32, %arg2: memref<8x128xf32, #tpu.memory_space<vmem>>, %arg3: memref<128x128xf32, #tpu.memory_space<vmem>>, %arg4: memref<1x128xf32, #tpu.memory_space<vmem>>, %arg5: memref<1x1xf32, #tpu.memory_space<smem>>, %arg6: memref<8x128xf32, #tpu.memory_space<vmem>>) attributes {dimension_semantics = [#tpu.dimension_semantics<parallel>, #tpu.dimension_semantics<arbitrary>], iteration_bounds = array<i64: 2, 1>, scalar_prefetch = 0 : i64, scratch_operands = 0 : i64, tpu.core_type = #tpu.core_type<tc>, window_params = [{transform_indices = @transform_0, window_bounds = array<i64: 8, 128>}, {transform_indices = @transform_1, window_bounds = array<i64: 128, 128>}, {pipeline_mode = #tpu.pipeline_mode<synchronous>, transform_indices = @transform_2, window_bounds = array<i64: 1, 128>}, {transform_indices = @transform_3, window_bounds = array<i64: 1, 1>}, {transform_indices = @transform_4, window_bounds = array<i64: 8, 128>}]} {
    %c0 = arith.constant 0 : index
    %c0_0 = arith.constant 0 : index
    %0 = vector.load %arg2[%c0, %c0_0] : memref<8x128xf32, #tpu.memory_space<vmem>>, vector<8x128xf32>
    %c0_1 = arith.constant 0 : index
    %c0_2 = arith.constant 0 : index
    %1 = vector.load %arg3[%c0_1, %c0_2] : memref<128x128xf32, #tpu.memory_space<vmem>>, vector<128x128xf32>
    %cst = arith.constant dense<0.000000e+00> : vector<8x128xf32>
    %2 = tpu.matmul %0, %1, %cst {dimension_numbers = #tpu.dot_dimension_numbers<[1], [0], [0], [1], [0, 0, 1, 1], [], []>} : vector<8x128xf32>, vector<128x128xf32>, vector<8x128xf32> -> vector<8x128xf32>
    %3 = arith.mulf %0, %0 : vector<8x128xf32>
    %cst_3 = arith.constant dense<0.000000e+00> : vector<8xf32>
    %4 = vector.multi_reduction <add>, %3, %cst_3 [1] : vector<8x128xf32> to vector<8xf32>
    %5 = vector.shape_cast %4 : vector<8xf32> to vector<8x1xf32>
    %6 = arith.mulf %2, %2 : vector<8x128xf32>
    %cst_4 = arith.constant dense<0.000000e+00> : vector<8xf32>
    %7 = vector.multi_reduction <add>, %6, %cst_4 [1] : vector<8x128xf32> to vector<8xf32>
    %8 = vector.shape_cast %7 : vector<8xf32> to vector<8x1xf32>
    %9 = math.sqrt %5 : vector<8x1xf32>
    %cst_5 = arith.constant 1.000000e-15 : f32
    %10 = vector.broadcast %cst_5 : f32 to vector<8x1xf32>
    %11 = arith.maximumf %9, %10 : vector<8x1xf32>
    %12 = math.sqrt %8 : vector<8x1xf32>
    %cst_6 = arith.constant 1.000000e-15 : f32
    %13 = vector.broadcast %cst_6 : f32 to vector<8x1xf32>
    %14 = arith.maximumf %12, %13 : vector<8x1xf32>
    %15 = tpu.reciprocal %11 : vector<8x1xf32> -> vector<8x1xf32>
    %16 = arith.mulf %14, %15 : vector<8x1xf32>
    %cst_7 = arith.constant 1.000000e+00 : f32
    %17 = vector.broadcast %cst_7 : f32 to vector<8x1xf32>
    %18 = arith.mulf %17, %11 : vector<8x1xf32>
    %cst_8 = arith.constant -1.000000e+00 : f32
    %cst_9 = arith.constant 1.000000e+00 : f32
    %19 = vector.broadcast %cst_8 : f32 to vector<8x1xf32>
    %20 = arith.maximumf %19, %18 : vector<8x1xf32>
    %21 = vector.broadcast %cst_9 : f32 to vector<8x1xf32>
    %22 = arith.minimumf %21, %20 : vector<8x1xf32>
    %23 = math.log1p %22 : vector<8x1xf32>
    %cst_10 = arith.constant 0.000000e+00 : f32
    %24 = vector.broadcast %cst_10 : f32 to vector<8x1xf32>
    %25 = arith.subf %24, %22 : vector<8x1xf32>
    %26 = math.log1p %25 : vector<8x1xf32>
    %27 = arith.subf %23, %26 : vector<8x1xf32>
    %cst_11 = arith.constant 5.000000e-01 : f32
    %28 = vector.broadcast %cst_11 : f32 to vector<8x1xf32>
    %29 = arith.mulf %28, %27 : vector<8x1xf32>
    %30 = arith.mulf %16, %29 : vector<8x1xf32>
    %31 = math.tanh %30 : vector<8x1xf32>
    %32 = tpu.reciprocal %14 : vector<8x1xf32> -> vector<8x1xf32>
    %33 = arith.mulf %31, %32 : vector<8x1xf32>
    %cst_12 = arith.constant 1.000000e+00 : f32
    %34 = vector.broadcast %cst_12 : f32 to vector<8x1xf32>
    %35 = arith.mulf %33, %34 : vector<8x1xf32>
    %cst_13 = arith.constant 0.000000e+00 : f32
    %36 = vector.broadcast %cst_13 : f32 to vector<8x1xf32>
    %37 = arith.cmpf oeq, %8, %36 : vector<8x1xf32>
    %cst_14 = arith.constant 0.000000e+00 : f32
    %38 = vector.broadcast %cst_14 : f32 to vector<8x1xf32>
    %39 = arith.select %37, %38, %35 : vector<8x1xi1>, vector<8x1xf32>
    %40 = arith.mulf %39, %14 : vector<8x1xf32>
    %cst_15 = arith.constant 1.000000e-15 : f32
    %41 = vector.broadcast %cst_15 : f32 to vector<8x1xf32>
    %42 = arith.maximumf %40, %41 : vector<8x1xf32>
    %cst_16 = arith.constant 0.995999991 : f32
    %43 = vector.broadcast %cst_16 : f32 to vector<8x1xf32>
    %44 = arith.cmpf ogt, %42, %43 : vector<8x1xf32>
    %45 = tpu.reciprocal %42 : vector<8x1xf32> -> vector<8x1xf32>
    %cst_17 = arith.constant 0.995999991 : f32
    %46 = vector.broadcast %cst_17 : f32 to vector<8x1xf32>
    %47 = arith.mulf %46, %45 : vector<8x1xf32>
    %cst_18 = arith.constant 1.000000e+00 : f32
    %48 = vector.broadcast %cst_18 : f32 to vector<8x1xf32>
    %49 = arith.select %44, %47, %48 : vector<8x1xi1>, vector<8x1xf32>
    %50 = arith.mulf %39, %49 : vector<8x1xf32>
    %c0_19 = arith.constant 0 : index
    %c0_20 = arith.constant 0 : index
    %51 = vector.load %arg4[%c0_19, %c0_20] : memref<1x128xf32, #tpu.memory_space<vmem>>, vector<1x128xf32>
    %c0_21 = arith.constant 0 : index
    %c0_22 = arith.constant 0 : index
    %52 = memref.load %arg5[%c0_21, %c0_22] : memref<1x1xf32, #tpu.memory_space<smem>>
    %53 = vector.broadcast %51 : vector<1x128xf32> to vector<8x128xf32>
    %54 = arith.mulf %2, %53 : vector<8x128xf32>
    %cst_23 = arith.constant dense<0.000000e+00> : vector<8xf32>
    %55 = vector.multi_reduction <add>, %54, %cst_23 [1] : vector<8x128xf32> to vector<8xf32>
    %56 = vector.shape_cast %55 : vector<8xf32> to vector<8x1xf32>
    %cst_24 = arith.constant 0.995999991 : f32
    %57 = vector.broadcast %cst_24 : f32 to vector<8x1xf32>
    %58 = arith.minimumf %42, %57 : vector<8x1xf32>
    %59 = arith.mulf %58, %58 : vector<8x1xf32>
    %60 = arith.mulf %50, %56 : vector<8x1xf32>
    %cst_25 = arith.constant 2.000000e+00 : f32
    %61 = vector.broadcast %cst_25 : f32 to vector<8x1xf32>
    %62 = arith.mulf %61, %60 : vector<8x1xf32>
    %cst_26 = arith.constant 1.000000e+00 : f32
    %63 = vector.broadcast %cst_26 : f32 to vector<8x1xf32>
    %64 = arith.addf %63, %62 : vector<8x1xf32>
    %cst_27 = arith.constant 1.000000e+00 : f32
    %65 = arith.mulf %cst_27, %52 : f32
    %66 = vector.broadcast %65 : f32 to vector<8x1xf32>
    %67 = arith.addf %64, %66 : vector<8x1xf32>
    %cst_28 = arith.constant 1.000000e+00 : f32
    %68 = vector.broadcast %cst_28 : f32 to vector<8x1xf32>
    %69 = arith.mulf %68, %59 : vector<8x1xf32>
    %cst_29 = arith.constant 1.000000e+00 : f32
    %70 = vector.broadcast %cst_29 : f32 to vector<8x1xf32>
    %71 = arith.subf %70, %69 : vector<8x1xf32>
    %cst_30 = arith.constant 1.000000e+00 : f32
    %72 = vector.broadcast %cst_30 : f32 to vector<8x1xf32>
    %73 = arith.addf %72, %62 : vector<8x1xf32>
    %cst_31 = arith.constant 1.000000e+00 : f32
    %74 = arith.mulf %cst_31, %52 : f32
    %75 = vector.broadcast %74 : f32 to vector<8x1xf32>
    %76 = arith.mulf %75, %59 : vector<8x1xf32>
    %77 = arith.addf %73, %76 : vector<8x1xf32>
    %cst_32 = arith.constant 1.000000e-15 : f32
    %78 = vector.broadcast %cst_32 : f32 to vector<8x1xf32>
    %79 = arith.maximumf %77, %78 : vector<8x1xf32>
    %80 = tpu.reciprocal %79 : vector<8x1xf32> -> vector<8x1xf32>
    %81 = arith.mulf %50, %67 : vector<8x1xf32>
    %82 = arith.mulf %81, %80 : vector<8x1xf32>
    %83 = arith.mulf %71, %80 : vector<8x1xf32>
    %84 = arith.mulf %82, %82 : vector<8x1xf32>
    %85 = arith.mulf %84, %8 : vector<8x1xf32>
    %86 = arith.mulf %82, %83 : vector<8x1xf32>
    %cst_33 = arith.constant 2.000000e+00 : f32
    %87 = vector.broadcast %cst_33 : f32 to vector<8x1xf32>
    %88 = arith.mulf %87, %86 : vector<8x1xf32>
    %89 = arith.mulf %88, %56 : vector<8x1xf32>
    %90 = arith.addf %85, %89 : vector<8x1xf32>
    %91 = arith.mulf %83, %83 : vector<8x1xf32>
    %92 = vector.broadcast %52 : f32 to vector<8x1xf32>
    %93 = arith.mulf %91, %92 : vector<8x1xf32>
    %94 = arith.addf %90, %93 : vector<8x1xf32>
    %cst_34 = arith.constant 0.000000e+00 : f32
    %95 = vector.broadcast %cst_34 : f32 to vector<8x1xf32>
    %96 = arith.maximumf %94, %95 : vector<8x1xf32>
    %97 = math.sqrt %96 : vector<8x1xf32>
    %cst_35 = arith.constant 1.000000e-15 : f32
    %98 = vector.broadcast %cst_35 : f32 to vector<8x1xf32>
    %99 = arith.maximumf %97, %98 : vector<8x1xf32>
    %cst_36 = arith.constant 0.995999991 : f32
    %100 = vector.broadcast %cst_36 : f32 to vector<8x1xf32>
    %101 = arith.cmpf ogt, %99, %100 : vector<8x1xf32>
    %102 = tpu.reciprocal %99 : vector<8x1xf32> -> vector<8x1xf32>
    %cst_37 = arith.constant 0.995999991 : f32
    %103 = vector.broadcast %cst_37 : f32 to vector<8x1xf32>
    %104 = arith.mulf %103, %102 : vector<8x1xf32>
    %cst_38 = arith.constant 1.000000e+00 : f32
    %105 = vector.broadcast %cst_38 : f32 to vector<8x1xf32>
    %106 = arith.select %101, %104, %105 : vector<8x1xi1>, vector<8x1xf32>
    %107 = arith.mulf %106, %82 : vector<8x1xf32>
    %108 = vector.broadcast %107 : vector<8x1xf32> to vector<8x128xf32>
    %109 = arith.mulf %108, %2 : vector<8x128xf32>
    %110 = arith.mulf %106, %83 : vector<8x1xf32>
    %111 = vector.broadcast %110 : vector<8x1xf32> to vector<8x128xf32>
    %112 = vector.broadcast %51 : vector<1x128xf32> to vector<8x128xf32>
    %113 = arith.mulf %111, %112 : vector<8x128xf32>
    %114 = arith.addf %109, %113 : vector<8x128xf32>
    %c0_39 = arith.constant 0 : index
    %c0_40 = arith.constant 0 : index
    %115 = vector.load %arg6[%c0_39, %c0_40] : memref<8x128xf32, #tpu.memory_space<vmem>>, vector<8x128xf32>
    tpu.vector_store %arg6[%c0_39, %c0_40], %114 {strides = array<i32>} : memref<8x128xf32, #tpu.memory_space<vmem>>, vector<8x128xf32>,
    return
  }
  func.func @transform_0(%arg0: i32, %arg1: i32) -> (i32, i32) {
    %c0_i32 = arith.constant 0 : i32
    return %arg0, %arg1 : i32, i32
  }
  func.func @transform_1(%arg0: i32, %arg1: i32) -> (i32, i32) {
    %c0_i32 = arith.constant 0 : i32
    %c0_i32_0 = arith.constant 0 : i32
    return %arg1, %c0_i32 : i32, i32
  }
  func.func @transform_2(%arg0: i32, %arg1: i32) -> (i32, i32) {
    %c0_i32 = arith.constant 0 : i32
    %c0_i32_0 = arith.constant 0 : i32
    %c0_i32_1 = arith.constant 0 : i32
    return %c0_i32, %c0_i32_0 : i32, i32
  }
  func.func @transform_3(%arg0: i32, %arg1: i32) -> (i32, i32) {
    %c0_i32 = arith.constant 0 : i32
    %c0_i32_0 = arith.constant 0 : i32
    %c0_i32_1 = arith.constant 0 : i32
    return %c0_i32, %c0_i32_0 : i32, i32
  }
  func.func @transform_4(%arg0: i32, %arg1: i32) -> (i32, i32) {
    %c0_i32 = arith.constant 0 : i32
    %c0_i32_0 = arith.constant 0 : i32
    return %arg0, %c0_i32 : i32, i32
  }
}

</mosaic_0001>

<llo_original>
// kernel: tpu_custom_call.1
$region0: #{tpu_custom_call.1}
  #allocation0 [shape = 'u32[]', space=smem, size = 0x4, offset = 0x4, fixed_abs, tag = 'smem constant byte address 0x4 - core index']
  #allocation1 [shape = 'u32[144,128]{1,0:T(1,128)}', space=vmem, size = 0x12000, scoped, tag = 'internal scratch']
  #allocation2 [shape = 'f32[1,1]{1,0:T(1,128)S(6)}', space=smem, size = 0x200, scoped, tag = 'scoped memory for tpu_custom_call.1']
  %s0 = inlined_call_operand.hbm [shape: f32[16,128], index: 0, kind: input, shape index: {}]
  %s1 = inlined_call_operand.hbm [shape: f32[128,128], index: 1, kind: input, shape index: {}]
  %s2 = inlined_call_operand.vmem [shape: f32[1,128], index: 2, kind: input, shape index: {}]
  %s3 = inlined_call_operand.<no memory space> [shape: f32[1,1], index: 3, kind: input, shape index: {}]
  %s4 = inlined_call_operand.hbm [shape: f32[16,128], index: 4, kind: output, shape index: {}]
  %s5 = sld [smem:[#allocation0]]
  $region57: #{tpu_custom_call.1} parent=0
    _
  %s7 = ssub.s32 1, %s5
  %s8 = scalar_select 0, %s7, %s5
  %9 = sst [smem:[#allocation2]] %s3
  $region1: #{tpu_custom_call.1} parent=0
    #allocation3 [shape = 'u8[8192]{0}', space=vmem, size = 0x2000, scoped, tag = 'input window, operand 0']
    #allocation4 [shape = 's32[2]{0}', space=sflag, size = 0x8, scoped, tag = 'scoped memory for tpu_custom_call.1']
    #allocation5 [shape = 's32[2]{0}', space=sflag, size = 0x8, scoped, tag = 'scoped memory for tpu_custom_call.1']
    #allocation6 [shape = 'u8[65536]{0}', space=vmem, size = 0x10000, scoped, tag = 'input window, operand 1, single buffered']
    #allocation7 [shape = 's32[1]{0}', space=sflag, size = 0x4, scoped, tag = 'scoped memory for tpu_custom_call.1']
    #allocation8 [shape = 'u8[8192]{0}', space=vmem, size = 0x2000, scoped, tag = 'output window, operand 0']
    %10 = vsyncpa [#allocation4], 0
    %s11 = scalar_lea.sflag [#allocation4], 1
    %12 = vsyncpa %s11, 0
    %13 = vsyncpa [#allocation7], 0
    %14 = vsyncpa [#allocation5], 0
    %s15 = scalar_lea.sflag [#allocation5], 1
    %16 = vsyncpa %s15, 0
    loop: start=0, step=1, limit=4
    $region2: #{tpu_custom_call.1} parent=1 // loop_pre_header
      _
    $region3: #{tpu_custom_call.1} parent=1 // loop_header
      %s18 = sphi 0, %s22
      %p19 = scmp.ge.s32.totalorder %s18, 4
      %s25 = sphi 0, %s37
      %s26 = sphi 0, %s33
      %s27 = sphi 0, %s25
      %s28 = sphi 0, %s26
      %s29 = sphi 0, %s27
      %s30 = sphi 0, %s28
      %s42 = sphi 0, %s44
      %s45 = sphi 0, %s42
      %s46 = sphi 0, %s45
      %s62 = sphi 0, %s46
      %s68 = sphi 0, %s70
      %s71 = sphi 0, %s68
      %s72 = sphi 0, %s71
      %s88 = sphi 0, %s72
      %s92 = sphi 0, %s92
      %s94 = sphi 0, %s92
      %s95 = sphi 0, %s94
      %s109 = sphi 0, %s95
      %s113 = sphi 0, %s113
      %s115 = sphi 0, %s113
      %s116 = sphi 0, %s115
      %s130 = sphi 0, %s116
      %s136 = sphi 0, %s138
      %s139 = sphi 0, %s136
      %s140 = sphi 0, %s139
      %s156 = sphi 0, %s140
    $region4: #{tpu_custom_call.1} parent=1 // loop_header_branch
      %21 = sbr.rel (%p19) target = $region8
    $region5: #{tpu_custom_call.1} parent=1 // loop_body
      %s23 = ssub.s32 %s18, 1
      %s24 = ssub.s32 %s18, 2
      %s31 = sadd.s32 1, %s26
      %p32 = scmp.ge.s32.totalorder %s31, 1
      %s33 = scalar_select %p32, 0, %s31
      %s34 = sadd.s32 1, %s25
      %s35 = scalar_select %p32, %s34, %s25
      %p36 = scmp.ge.s32.totalorder %s35, 2
      %s37 = scalar_select %p36, 0, %s35
      %s38 = ssub.s32 %s25, %s37
      %s39 = ssub.s32 %s26, %s33
      %s40 = sor.u32 %s38, %s39
      %p41 = scmp.eq.s32.totalorder %s40, 0
      %s43 = sadd.s32 %s42, 1
      %s44 = scalar_select %p41, %s42, %s43
      %p47 = pneg %p41
      %p48 = scmp.eq.s32.totalorder %s18, 1
      %p49 = por %p47, %p48
      %p50 = scmp.ne.s32.totalorder %s42, %s45
      %p51 = scmp.eq.s32.totalorder %s18, 0
      %p52 = por %p50, %p51
      %p53 = scmp.ne.s32.totalorder %s42, %s45
      %p54 = scmp.eq.s32.totalorder %s23, 1
      %p55 = por %p53, %p54
      %p56 = scmp.ne.s32.totalorder %s45, %s46
      %p57 = scmp.eq.s32.totalorder %s23, 0
      %p58 = por %p56, %p57
      %p59 = scmp.ne.s32.totalorder %s45, %s46
      %p60 = scmp.eq.s32.totalorder %s24, 1
      %p61 = por %p59, %p60
      %p63 = scmp.ne.s32.totalorder %s46, %s62
      %p64 = scmp.eq.s32.totalorder %s24, 0
      %p65 = por %p63, %p64
      %s66 = ssub.s32 %s26, %s33
      %p67 = scmp.eq.s32.totalorder %s66, 0
      %s69 = sadd.s32 %s68, 1
      %s70 = scalar_select %p67, %s68, %s69
      %p73 = pneg %p67
      %p74 = scmp.eq.s32.totalorder %s18, 1
      %p75 = por %p73, %p74
      %p76 = scmp.ne.s32.totalorder %s68, %s71
      %p77 = scmp.eq.s32.totalorder %s18, 0
      %p78 = por %p76, %p77
      %p79 = scmp.ne.s32.totalorder %s68, %s71
      %p80 = scmp.eq.s32.totalorder %s23, 1
      %p81 = por %p79, %p80
      %p82 = scmp.ne.s32.totalorder %s71, %s72
      %p83 = scmp.eq.s32.totalorder %s23, 0
      %p84 = por %p82, %p83
      %p85 = scmp.ne.s32.totalorder %s71, %s72
      %p86 = scmp.eq.s32.totalorder %s24, 1
      %p87 = por %p85, %p86
      %p89 = scmp.ne.s32.totalorder %s72, %s88
      %p90 = scmp.eq.s32.totalorder %s24, 0
      %p91 = por %p89, %p90
      %s93 = sadd.s32 %s92, 1
      %p96 = scmp.eq.s32.totalorder %s18, 1
      %p97 = scmp.ne.s32.totalorder %s92, %s94
      %p98 = scmp.eq.s32.totalorder %s18, 0
      %p99 = por %p97, %p98
      %p100 = scmp.ne.s32.totalorder %s92, %s94
      %p101 = scmp.eq.s32.totalorder %s23, 1
      %p102 = por %p100, %p101
      %p103 = scmp.ne.s32.totalorder %s94, %s95
      %p104 = scmp.eq.s32.totalorder %s23, 0
      %p105 = por %p103, %p104
      %p106 = scmp.ne.s32.totalorder %s94, %s95
      %p107 = scmp.eq.s32.totalorder %s24, 1
      %p108 = por %p106, %p107
      %p110 = scmp.ne.s32.totalorder %s95, %s109
      %p111 = scmp.eq.s32.totalorder %s24, 0
      %p112 = por %p110, %p111
      %s114 = sadd.s32 %s113, 1
      %p117 = scmp.eq.s32.totalorder %s18, 1
      %p118 = scmp.ne.s32.totalorder %s113, %s115
      %p119 = scmp.eq.s32.totalorder %s18, 0
      %p120 = por %p118, %p119
      %p121 = scmp.ne.s32.totalorder %s113, %s115
      %p122 = scmp.eq.s32.totalorder %s23, 1
      %p123 = por %p121, %p122
      %p124 = scmp.ne.s32.totalorder %s115, %s116
      %p125 = scmp.eq.s32.totalorder %s23, 0
      %p126 = por %p124, %p125
      %p127 = scmp.ne.s32.totalorder %s115, %s116
      %p128 = scmp.eq.s32.totalorder %s24, 1
      %p129 = por %p127, %p128
      %p131 = scmp.ne.s32.totalorder %s116, %s130
      %p132 = scmp.eq.s32.totalorder %s24, 0
      %p133 = por %p131, %p132
      %s134 = ssub.s32 %s25, %s37
      %p135 = scmp.eq.s32.totalorder %s134, 0
      %s137 = sadd.s32 %s136, 1
      %s138 = scalar_select %p135, %s136, %s137
      %p141 = pneg %p135
      %p142 = scmp.eq.s32.totalorder %s18, 1
      %p143 = por %p141, %p142
      %p144 = scmp.ne.s32.totalorder %s136, %s139
      %p145 = scmp.eq.s32.totalorder %s18, 0
      %p146 = por %p144, %p145
      %p147 = scmp.ne.s32.totalorder %s136, %s139
      %p148 = scmp.eq.s32.totalorder %s23, 1
      %p149 = por %p147, %p148
      %p150 = scmp.ne.s32.totalorder %s139, %s140
      %p151 = scmp.eq.s32.totalorder %s23, 0
      %p152 = por %p150, %p151
      %p153 = scmp.ne.s32.totalorder %s139, %s140
      %p154 = scmp.eq.s32.totalorder %s24, 1
      %p155 = por %p153, %p154
      %p157 = scmp.ne.s32.totalorder %s140, %s156
      %p158 = scmp.eq.s32.totalorder %s24, 0
      %p159 = por %p157, %p158
      %p160 = scmp.le.s32.totalorder 1, %s18
      %p161 = scmp.lt.s32.totalorder %s18, 3
      %p162 = pnand %p160, %p161
      %p163 = pneg %p162
      // Predicated region
      $region9: #{tpu_custom_call.1} parent=5 // pred_check
        _
      $region10: #{tpu_custom_call.1} parent=5 // pred_check_branch
        %165 = sbr.rel (%p162) target = $region12
      $region11: #{tpu_custom_call.1} parent=5 // pred_region
        %s166 = ssub.s32 %s18, 1
        // Predicated region
        $region13: #{tpu_custom_call.1} parent=11 // pred_check
          %p167 = pneg %p84
        $region14: #{tpu_custom_call.1} parent=11 // pred_check_branch
          %169 = sbr.rel (%p167) target = $region16
        $region15: #{tpu_custom_call.1} parent=11 // pred_region
          %s170 = smul.u32 16, %s28
          %s172 = ssub.s32 2048, 2048
          %173 = vsyncadd [#allocation7], %s172
          %s174 = smul.addr %s170, 128
          %s175 = scalar_lea.hbm %s1, %s174
          %s176 = sshll.u32 [#allocation6], 4
          %s177 = int_to_ptr.vmem [resolvable:$true] %s176
          %182 = dma.hbm_to_vmem [thread:$0]  %s175, 2048, %s177, [#allocation7], 128, 128, 8
        $region16: #{tpu_custom_call.1} parent=11 // pred_fallthru
          _
        // Predicated region
        $region17: #{tpu_custom_call.1} parent=11 // pred_check
          %p183 = pneg %p105
        $region18: #{tpu_custom_call.1} parent=11 // pred_check_branch
          %185 = sbr.rel (%p183) target = $region20
        $region19: #{tpu_custom_call.1} parent=11 // pred_region
          _
        $region20: #{tpu_custom_call.1} parent=11 // pred_fallthru
          _
        // Predicated region
        $region21: #{tpu_custom_call.1} parent=11 // pred_check
          %p186 = pneg %p126
        $region22: #{tpu_custom_call.1} parent=11 // pred_check_branch
          %188 = sbr.rel (%p186) target = $region24
        $region23: #{tpu_custom_call.1} parent=11 // pred_region
          _
        $region24: #{tpu_custom_call.1} parent=11 // pred_fallthru
          _
      $region12: #{tpu_custom_call.1} parent=5 // pred_fallthru
        _
      %p189 = scmp.lt.s32.totalorder %s18, 2
      // Predicated region
      $region25: #{tpu_custom_call.1} parent=5 // pred_check
        %p190 = pneg %p189
      $region26: #{tpu_custom_call.1} parent=5 // pred_check_branch
        %192 = sbr.rel (%p190) target = $region28
      $region27: #{tpu_custom_call.1} parent=5 // pred_region
        // Predicated region
        $region29: #{tpu_custom_call.1} parent=27 // pred_check
          %p193 = pneg %p52
        $region30: #{tpu_custom_call.1} parent=27 // pred_check_branch
          %195 = sbr.rel (%p193) target = $region32
        $region31: #{tpu_custom_call.1} parent=27 // pred_region
          %s196 = sand.u32 %s42, 1
          %s197 = scalar_lea.sflag [#allocation4], %s196
          %s198 = sand.u32 %s42, 1
          %s199 = smul.addr %s198, 8
          %s200 = scalar_lea.vmem [#allocation3], %s199
          %s202 = ssub.s32 128, 128
          %203 = vsyncadd %s197, %s202
          %s204 = sadd.s32 %s26, %s25
          %s205 = smul.addr %s204, 128
          %s206 = scalar_lea.hbm %s0, %s205
          %s208 = sshll.u32 %s200, 4
          %s209 = int_to_ptr.vmem [resolvable:$true] %s208
          %211 = dma.hbm_to_vmem [thread:$0]  %s206, 128, %s209, %s197
        $region32: #{tpu_custom_call.1} parent=27 // pred_fallthru
          _
      $region28: #{tpu_custom_call.1} parent=5 // pred_fallthru
        _
      %p212 = scmp.le.s32.totalorder 1, %s18
      %p213 = scmp.lt.s32.totalorder %s18, 3
      %p214 = pnand %p212, %p213
      %p215 = pneg %p214
      // Predicated region
      $region33: #{tpu_custom_call.1} parent=5 // pred_check
        _
      $region34: #{tpu_custom_call.1} parent=5 // pred_check_branch
        %217 = sbr.rel (%p214) target = $region36
      $region35: #{tpu_custom_call.1} parent=5 // pred_region
        %s218 = ssub.s32 %s18, 1
        %s219 = sand.u32 %s45, 1
        %s220 = scalar_lea.sflag [#allocation4], %s219
        %s221 = sand.u32 %s45, 1
        %s222 = smul.addr %s221, 8
        %s223 = scalar_lea.vmem [#allocation3], %s222
        // Predicated region
        $region37: #{tpu_custom_call.1} parent=35 // pred_check
          %p224 = pneg %p58
        $region38: #{tpu_custom_call.1} parent=35 // pred_check_branch
          %226 = sbr.rel (%p224) target = $region40
        $region39: #{tpu_custom_call.1} parent=35 // pred_region
          %227 = dma.done %s220, 128
        $region40: #{tpu_custom_call.1} parent=35 // pred_fallthru
          _
        // Predicated region
        $region41: #{tpu_custom_call.1} parent=35 // pred_check
          %p228 = pneg %p84
        $region42: #{tpu_custom_call.1} parent=35 // pred_check_branch
          %230 = sbr.rel (%p228) target = $region44
        $region43: #{tpu_custom_call.1} parent=35 // pred_region
          %231 = dma.done [#allocation7], 2048
        $region44: #{tpu_custom_call.1} parent=35 // pred_fallthru
          _
        %s232 = sand.u32 %s45, 1
        %s233 = scalar_lea.sflag [#allocation4], %s232
        %s234 = sand.u32 %s45, 1
        %s235 = smul.addr %s234, 8
        %s236 = scalar_lea.vmem [#allocation3], %s235
        %p237 = pneg %p58
        %p238 = pneg %p55
        %p239 = pneg %p84
        %p240 = pneg %p81
        %p241 = pneg %p105
        %p242 = pneg %p102
        %p243 = pneg %p126
        %p244 = pneg %p123
        %p245 = pneg %p152
        %p246 = pneg %p149
        %s247 = sand.u32 %s139, 1
        %s248 = scalar_lea.sflag [#allocation5], %s247
        %s249 = sand.u32 %s139, 1
        %s250 = smul.addr %s249, 8
        %s251 = scalar_lea.vmem [#allocation8], %s250
        %s252 = smul.u32 16, %s28
        %v253 = vld [vmem:[%s223] sm:$0xff]
        %v254 = vld [vmem:[#allocation6] sm:$0xff]
        %v255 = vld [vmem:[#allocation6 + $0x8] sm:$0xff]
        %v256 = vld [vmem:[#allocation6 + $0x10] sm:$0xff]
        %v257 = vld [vmem:[#allocation6 + $0x18] sm:$0xff]
        %v258 = vld [vmem:[#allocation6 + $0x20] sm:$0xff]
        %v259 = vld [vmem:[#allocation6 + $0x28] sm:$0xff]
        %v260 = vld [vmem:[#allocation6 + $0x30] sm:$0xff]
        %v261 = vld [vmem:[#allocation6 + $0x38] sm:$0xff]
        %v262 = vld [vmem:[#allocation6 + $0x40] sm:$0xff]
        %v263 = vld [vmem:[#allocation6 + $0x48] sm:$0xff]
        %v264 = vld [vmem:[#allocation6 + $0x50] sm:$0xff]
        %v265 = vld [vmem:[#allocation6 + $0x58] sm:$0xff]
        %v266 = vld [vmem:[#allocation6 + $0x60] sm:$0xff]
        %v267 = vld [vmem:[#allocation6 + $0x68] sm:$0xff]
        %v268 = vld [vmem:[#allocation6 + $0x70] sm:$0xff]
        %v269 = vld [vmem:[#allocation6 + $0x78] sm:$0xff]
        %270 = vmatprep.subr.mxu0 0.0
        %271 = vmatpush1.msra.mxu0 %v254
        %272 = vmatprep.subr.mxu0 0.0
        %273 = vmatpush1.msra.mxu0 %v255
        %274 = vmatprep.subr.mxu0 0.0
        %275 = vmatpush1.msra.mxu0 %v256
        %276 = vmatprep.subr.mxu0 0.0
        %277 = vmatpush1.msra.mxu0 %v257
        %278 = vmatprep.subr.mxu0 0.0
        %279 = vmatpush1.msra.mxu0 %v258
        %280 = vmatprep.subr.mxu0 0.0
        %281 = vmatpush1.msra.mxu0 %v259
        %282 = vmatprep.subr.mxu0 0.0
        %283 = vmatpush1.msra.mxu0 %v260
        %284 = vmatprep.subr.mxu0 0.0
        %285 = vmatpush1.msra.mxu0 %v261
        %286 = vmatprep.subr.mxu0 0.0
        %287 = vmatpush1.msra.mxu0 %v262
        %288 = vmatprep.subr.mxu0 0.0
        %289 = vmatpush1.msra.mxu0 %v263
        %290 = vmatprep.subr.mxu0 0.0
        %291 = vmatpush1.msra.mxu0 %v264
        %292 = vmatprep.subr.mxu0 0.0
        %293 = vmatpush1.msra.mxu0 %v265
        %294 = vmatprep.subr.mxu0 0.0
        %295 = vmatpush1.msra.mxu0 %v266
        %296 = vmatprep.subr.mxu0 0.0
        %297 = vmatpush1.msra.mxu0 %v267
        %298 = vmatprep.subr.mxu0 0.0
        %299 = vmatpush1.msra.mxu0 %v268
        %300 = vmatprep.subr.mxu0 0.0
        %301 = vmatpush1.msra.mxu0 %v269
        %302 = vmatprep.subr.mxu0 0.0
        %303 = vmatpush1.msra.mxu0 0.0
        %304 = vmatprep.subr.mxu0 0.0
        %305 = vmatpush1.msra.mxu0 0.0
        %306 = vmatprep.subr.mxu0 0.0
        %307 = vmatpush1.msra.mxu0 0.0
        %308 = vmatprep.subr.mxu0 0.0
        %309 = vmatpush1.msra.mxu0 0.0
        %310 = vmatprep.subr.mxu0 0.0
        %311 = vmatpush1.msra.mxu0 0.0
        %312 = vmatprep.subr.mxu0 0.0
        %313 = vmatpush1.msra.mxu0 0.0
        %314 = vmatprep.subr.mxu0 0.0
        %315 = vmatpush1.msra.mxu0 0.0
        %316 = vmatprep.subr.mxu0 0.0
        %317 = vmatpush1.msra.mxu0 0.0
        %318 = vmatprep.subr.mxu0 0.0
        %319 = vmatpush1.msra.mxu0 0.0
        %320 = vmatprep.subr.mxu0 0.0
        %321 = vmatpush1.msra.mxu0 0.0
        %322 = vmatprep.subr.mxu0 0.0
        %323 = vmatpush1.msra.mxu0 0.0
        %324 = vmatprep.subr.mxu0 0.0
        %325 = vmatpush1.msra.mxu0 0.0
        %326 = vmatprep.subr.mxu0 0.0
        %327 = vmatpush1.msra.mxu0 0.0
        %328 = vmatprep.subr.mxu0 0.0
        %329 = vmatpush1.msra.mxu0 0.0
        %330 = vmatprep.subr.mxu0 0.0
        %331 = vmatpush1.msra.mxu0 0.0
        %332 = vmatprep.subr.mxu0 0.0
        %333 = vmatpush1.msra.mxu0 0.0
        %334 = vmatprep.mubr.f32.mxu0 0.0
        %335 = vmatmul.mubr.f32.gmra.mrb[0].mxu0 %v253
        %v336 = vpop.f32.mrb[0].mxu0
        %v337 = vadd.f32 0.0, %v336
        %v338 = vpop.f32.mrb[0].mxu0
        %339 = vdwg.mxu0
        %v340 = vmul.f32 %v253, %v253
        %341 = vadd.xlane.f32.xlu0 %v340
        %v342 = vpop.xlane.xlu0 %341
        %v343 = vmul.f32 %v337, %v337
        %344 = vadd.xlane.f32.xlu0 %v343
        %v345 = vpop.xlane.xlu0 %344
        %v346 = vrsqrt.pop %v342
        %v347 = vmul.f32 %v342, %v346
        %vm348 = vcmp.eq.f32.partialorder %v342, inf
        %v349 = vsel %vm348, %v342, %v347
        %vm350 = vcmp.eq.f32.partialorder %v342, 0.0
        %v351 = vand.u32 %v342, 2147483648
        %v352 = vsel %vm350, %v351, %v349
        %v353 = vmax.f32 %v352, 1e-15
        %v354 = vrsqrt.pop %v345
        %v355 = vmul.f32 %v345, %v354
        %vm356 = vcmp.eq.f32.partialorder %v345, inf
        %v357 = vsel %vm356, %v345, %v355
        %vm358 = vcmp.eq.f32.partialorder %v345, 0.0
        %v359 = vand.u32 %v345, 2147483648
        %v360 = vsel %vm358, %v359, %v357
        %v361 = vmax.f32 %v360, 1e-15
        %v362 = vrcp.pop %v353
        %v363 = vmul.f32 %v361, %v362
        %v364 = vmax.f32 %v353, -1.0
        %v365 = vmin.f32 %v364, 1.0
        %v366 = vadd.f32 %v365, 1.0
        %v367 = vlog2.pop %v366
        %v368 = vmul.f32 %v367, 0.6931472
        %v369 = vmul.f32 -0.5, %v365
        %v370 = vadd.f32 %v369, 1.0
        %v371 = vmul.f32 %v370, %v365
        %v372 = vand.u32 2147483647, %v365
        %vm373 = vcmp.lt.f32.partialorder %v372, 0.0004427343
        %v374 = vsel %vm373, %v371, %v368
        %v375 = vsub.f32 0.0, %v365
        %v376 = vadd.f32 %v375, 1.0
        %v377 = vlog2.pop %v376
        %v378 = vmul.f32 %v377, 0.6931472
        %v379 = vmul.f32 -0.5, %v375
        %v380 = vadd.f32 %v379, 1.0
        %v381 = vmul.f32 %v380, %v375
        %v382 = vand.u32 2147483647, %v375
        %vm383 = vcmp.lt.f32.partialorder %v382, 0.0004427343
        %v384 = vsel %vm383, %v381, %v378
        %v385 = vsub.f32 %v374, %v384
        %v386 = vmul.f32 %v385, 0.5
        %v387 = vmul.f32 %v363, %v386
        %v388 = vtanh.pop %v387
        %v389 = vrcp.pop %v361
        %v390 = vmul.f32 %v388, %v389
        %vm391 = vcmp.eq.f32.partialorder %v345, 0.0
        %v392 = vsel %vm391, 0.0, %v390
        %v393 = vmul.f32 %v392, %v361
        %v394 = vmax.f32 %v393, 1e-15
        %vm395 = vcmp.gt.f32.partialorder %v394, 0.996
        %v396 = vrcp.pop %v394
        %v397 = vmul.f32 %v396, 0.996
        %v398 = vsel %vm395, %v397, 1.0
        %v399 = vmul.f32 %v392, %v398
        %v400 = vld [vmem:[%s2] sm:$0x1]
        %s401 = sld [smem:[#allocation2]]
        %v403 = vlaneseq
        %v404 = vshrl.u32 %v403, 7
        %v405 = vsub.s32 0, %v404
        %v406 = vrot.slane %v400, %v405
        %v408 = vmul.f32 %v337, %v406
        %409 = vadd.xlane.f32.xlu0 %v408
        %v410 = vpop.xlane.xlu0 %409
        %v411 = vmin.f32 %v394, 0.996
        %v412 = vmul.f32 %v411, %v411
        %v413 = vmul.f32 %v399, %v410
        %v414 = vmul.f32 %v413, 2.0
        %v415 = vadd.f32 %v414, 1.0
        %v416 = vstv %s401
        %v417 = vadd.f32 %v415, %v416
        %v418 = vsub.f32 1.0, %v412
        %v419 = vmul.f32 %v416, %v412
        %v420 = vadd.f32 %v415, %v419
        %v421 = vmax.f32 %v420, 1e-15
        %v422 = vrcp.pop %v421
        %v423 = vmul.f32 %v399, %v417
        %v424 = vmul.f32 %v423, %v422
        %v425 = vmul.f32 %v418, %v422
        %v426 = vmul.f32 %v424, %v424
        %v427 = vmul.f32 %v426, %v345
        %v428 = vmul.f32 %v424, %v425
        %v429 = vmul.f32 %v428, 2.0
        %v430 = vmul.f32 %v429, %v410
        %v431 = vadd.f32 %v427, %v430
        %v432 = vmul.f32 %v425, %v425
        %v433 = vmul.f32 %v432, %v416
        %v434 = vadd.f32 %v431, %v433
        %v435 = vmax.f32 %v434, 0.0
        %v436 = vrsqrt.pop %v435
        %v437 = vmul.f32 %v435, %v436
        %vm438 = vcmp.eq.f32.partialorder %v435, inf
        %v439 = vsel %vm438, %v435, %v437
        %vm440 = vcmp.eq.f32.partialorder %v435, 0.0
        %v441 = vand.u32 %v435, 2147483648
        %v442 = vsel %vm440, %v441, %v439
        %v443 = vmax.f32 %v442, 1e-15
        %vm444 = vcmp.gt.f32.partialorder %v443, 0.996
        %v445 = vrcp.pop %v443
        %v446 = vmul.f32 %v445, 0.996
        %v447 = vsel %vm444, %v446, 1.0
        %v448 = vmul.f32 %v447, %v424
        %v449 = vmul.f32 %v448, %v337
        %v450 = vmul.f32 %v447, %v425
        %v451 = vmul.f32 %v450, %v406
        %v452 = vadd.f32 %v449, %v451
        %453 = vst [vmem:[%s251] sm:$0xff] %v452
        %s454 = sand.u32 %s139, 1
        %s455 = scalar_lea.sflag [#allocation5], %s454
        %s456 = sand.u32 %s139, 1
        %s457 = smul.addr %s456, 8
        %s458 = scalar_lea.vmem [#allocation8], %s457
        // Predicated region
        $region45: #{tpu_custom_call.1} parent=35 // pred_check
          %p459 = pneg %p149
        $region46: #{tpu_custom_call.1} parent=35 // pred_check_branch
          %461 = sbr.rel (%p459) target = $region48
        $region47: #{tpu_custom_call.1} parent=35 // pred_region
          %s463 = ssub.s32 128, 128
          %464 = vsyncadd %s455, %s463
          %s465 = smul.addr %s27, 128
          %s466 = scalar_lea.hbm %s4, %s465
          %s468 = sshll.u32 %s458, 4
          %s469 = int_to_ptr.vmem [resolvable:$true] %s468
          %471 = dma.vmem_to_hbm [thread:$0]  %s469, 128, %s466, %s455
        $region48: #{tpu_custom_call.1} parent=35 // pred_fallthru
          _
      $region36: #{tpu_custom_call.1} parent=5 // pred_fallthru
        _
      %p472 = scmp.le.s32.totalorder 2, %s18
      // Predicated region
      $region49: #{tpu_custom_call.1} parent=5 // pred_check
        %p473 = pneg %p472
      $region50: #{tpu_custom_call.1} parent=5 // pred_check_branch
        %475 = sbr.rel (%p473) target = $region52
      $region51: #{tpu_custom_call.1} parent=5 // pred_region
        %s476 = ssub.s32 %s18, 2
        // Predicated region
        $region53: #{tpu_custom_call.1} parent=51 // pred_check
          %p477 = pneg %p155
        $region54: #{tpu_custom_call.1} parent=51 // pred_check_branch
          %479 = sbr.rel (%p477) target = $region56
        $region55: #{tpu_custom_call.1} parent=51 // pred_region
          %s480 = sand.u32 %s140, 1
          %s481 = scalar_lea.sflag [#allocation5], %s480
          %s482 = sand.u32 %s140, 1
          %s483 = smul.addr %s482, 8
          %s484 = scalar_lea.vmem [#allocation8], %s483
          %485 = dma.done %s481, 128
        $region56: #{tpu_custom_call.1} parent=51 // pred_fallthru
          _
      $region52: #{tpu_custom_call.1} parent=5 // pred_fallthru
        _
    $region6: #{tpu_custom_call.1} parent=1 // loop_footer
      %s22 = sadd.s32 1, %s18
    $region7: #{tpu_custom_call.1} parent=1 // loop_footer_branch
      %17 = sbr.rel target = $region3
    $region8: #{tpu_custom_call.1} parent=1 // loop_exit
      _
    %486 = vsyncpa [#allocation4], 1
    %s487 = scalar_lea.sflag [#allocation4], 1
    %488 = vsyncpa %s487, 1
    %489 = vsyncpa [#allocation7], 1
    %490 = vsyncpa [#allocation5], 1
    %s491 = scalar_lea.sflag [#allocation5], 1
    %492 = vsyncpa %s491, 1

// kernel: tpu_custom_call.1
$region0: #{tpu_custom_call.1}
  #allocation0 [shape = 'u32[]', space=smem, size = 0x4, offset = 0x4, fixed_abs, tag = 'smem constant byte address 0x4 - core index']
  #allocation1 [shape = 'u32[144,128]{1,0:T(1,128)}', space=vmem, size = 0x12000, scoped, tag = 'internal scratch']
  #allocation2 [shape = 'f32[1,1]{1,0:T(1,128)S(6)}', space=smem, size = 0x200, scoped, tag = 'scoped memory for tpu_custom_call.1']
  %s0 = inlined_call_operand.hbm [shape: f32[16,128], index: 0, kind: input, shape index: {}]
  %s1 = inlined_call_operand.hbm [shape: f32[128,128], index: 1, kind: input, shape index: {}]
  %s2 = inlined_call_operand.vmem [shape: f32[1,128], index: 2, kind: input, shape index: {}]
  %s3 = inlined_call_operand.<no memory space> [shape: f32[1,1], index: 3, kind: input, shape index: {}]
  %s4 = inlined_call_operand.hbm [shape: f32[16,128], index: 4, kind: output, shape index: {}]
  %s5 = sld [smem:[#allocation0]]
  $region57: #{tpu_custom_call.1} parent=0
    _
  %s7 = ssub.s32 1, %s5
  %s8 = scalar_select 0, %s7, %s5
  %9 = sst [smem:[#allocation2]] %s3
  $region1: #{tpu_custom_call.1} parent=0
    #allocation3 [shape = 'u8[8192]{0}', space=vmem, size = 0x2000, scoped, tag = 'input window, operand 0']
    #allocation4 [shape = 's32[2]{0}', space=sflag, size = 0x8, scoped, tag = 'scoped memory for tpu_custom_call.1']
    #allocation5 [shape = 's32[2]{0}', space=sflag, size = 0x8, scoped, tag = 'scoped memory for tpu_custom_call.1']
    #allocation6 [shape = 'u8[65536]{0}', space=vmem, size = 0x10000, scoped, tag = 'input window, operand 1, single buffered']
    #allocation7 [shape = 's32[1]{0}', space=sflag, size = 0x4, scoped, tag = 'scoped memory for tpu_custom_call.1']
    #allocation8 [shape = 'u8[8192]{0}', space=vmem, size = 0x2000, scoped, tag = 'output window, operand 0']
    %10 = vsyncpa [#allocation4], 0
    %s11 = scalar_lea.sflag [#allocation4], 1
    %12 = vsyncpa %s11, 0
    %13 = vsyncpa [#allocation7], 0
    %14 = vsyncpa [#allocation5], 0
    %s15 = scalar_lea.sflag [#allocation5], 1
    %16 = vsyncpa %s15, 0
    loop: start=0, step=1, limit=4
    $region2: #{tpu_custom_call.1} parent=1 // loop_pre_header
      _
    $region3: #{tpu_custom_call.1} parent=1 // loop_header
      %s18 = sphi 0, %s22
      %p19 = scmp.ge.s32.totalorder %s18, 4
      %s25 = sphi 0, %s37
      %s26 = sphi 0, %s33
      %s27 = sphi 0, %s25
      %s28 = sphi 0, %s26
      %s29 = sphi 0, %s27
      %s30 = sphi 0, %s28
      %s42 = sphi 0, %s44
      %s45 = sphi 0, %s42
      %s46 = sphi 0, %s45
      %s62 = sphi 0, %s46
      %s68 = sphi 0, %s70
      %s71 = sphi 0, %s68
      %s72 = sphi 0, %s71
      %s88 = sphi 0, %s72
      %s92 = sphi 0, %s92
      %s94 = sphi 0, %s92
      %s95 = sphi 0, %s94
      %s109 = sphi 0, %s95
      %s113 = sphi 0, %s113
      %s115 = sphi 0, %s113
      %s116 = sphi 0, %s115
      %s130 = sphi 0, %s116
      %s136 = sphi 0, %s138
      %s139 = sphi 0, %s136
      %s140 = sphi 0, %s139
      %s156 = sphi 0, %s140
    $region4: #{tpu_custom_call.1} parent=1 // loop_header_branch
      %21 = sbr.rel (%p19) target = $region8
    $region5: #{tpu_custom_call.1} parent=1 // loop_body
      %s23 = ssub.s32 %s18, 1
      %s24 = ssub.s32 %s18, 2
      %s31 = sadd.s32 1, %s26
      %p32 = scmp.ge.s32.totalorder %s31, 1
      %s33 = scalar_select %p32, 0, %s31
      %s34 = sadd.s32 1, %s25
      %s35 = scalar_select %p32, %s34, %s25
      %p36 = scmp.ge.s32.totalorder %s35, 2
      %s37 = scalar_select %p36, 0, %s35
      %s38 = ssub.s32 %s25, %s37
      %s39 = ssub.s32 %s26, %s33
      %s40 = sor.u32 %s38, %s39
      %p41 = scmp.eq.s32.totalorder %s40, 0
      %s43 = sadd.s32 %s42, 1
      %s44 = scalar_select %p41, %s42, %s43
      %p47 = pneg %p41
      %p48 = scmp.eq.s32.totalorder %s18, 1
      %p49 = por %p47, %p48
      %p50 = scmp.ne.s32.totalorder %s42, %s45
      %p51 = scmp.eq.s32.totalorder %s18, 0
      %p52 = por %p50, %p51
      %p53 = scmp.ne.s32.totalorder %s42, %s45
      %p54 = scmp.eq.s32.totalorder %s23, 1
      %p55 = por %p53, %p54
      %p56 = scmp.ne.s32.totalorder %s45, %s46
      %p57 = scmp.eq.s32.totalorder %s23, 0
      %p58 = por %p56, %p57
      %p59 = scmp.ne.s32.totalorder %s45, %s46
      %p60 = scmp.eq.s32.totalorder %s24, 1
      %p61 = por %p59, %p60
      %p63 = scmp.ne.s32.totalorder %s46, %s62
      %p64 = scmp.eq.s32.totalorder %s24, 0
      %p65 = por %p63, %p64
      %s66 = ssub.s32 %s26, %s33
      %p67 = scmp.eq.s32.totalorder %s66, 0
      %s69 = sadd.s32 %s68, 1
      %s70 = scalar_select %p67, %s68, %s69
      %p73 = pneg %p67
      %p74 = scmp.eq.s32.totalorder %s18, 1
      %p75 = por %p73, %p74
      %p76 = scmp.ne.s32.totalorder %s68, %s71
      %p77 = scmp.eq.s32.totalorder %s18, 0
      %p78 = por %p76, %p77
      %p79 = scmp.ne.s32.totalorder %s68, %s71
      %p80 = scmp.eq.s32.totalorder %s23, 1
      %p81 = por %p79, %p80
      %p82 = scmp.ne.s32.totalorder %s71, %s72
      %p83 = scmp.eq.s32.totalorder %s23, 0
      %p84 = por %p82, %p83
      %p85 = scmp.ne.s32.totalorder %s71, %s72
      %p86 = scmp.eq.s32.totalorder %s24, 1
      %p87 = por %p85, %p86
      %p89 = scmp.ne.s32.totalorder %s72, %s88
      %p90 = scmp.eq.s32.totalorder %s24, 0
      %p91 = por %p89, %p90
      %s93 = sadd.s32 %s92, 1
      %p96 = scmp.eq.s32.totalorder %s18, 1
      %p97 = scmp.ne.s32.totalorder %s92, %s94
      %p98 = scmp.eq.s32.totalorder %s18, 0
      %p99 = por %p97, %p98
      %p100 = scmp.ne.s32.totalorder %s92, %s94
      %p101 = scmp.eq.s32.totalorder %s23, 1
      %p102 = por %p100, %p101
      %p103 = scmp.ne.s32.totalorder %s94, %s95
      %p104 = scmp.eq.s32.totalorder %s23, 0
      %p105 = por %p103, %p104
      %p106 = scmp.ne.s32.totalorder %s94, %s95
      %p107 = scmp.eq.s32.totalorder %s24, 1
      %p108 = por %p106, %p107
      %p110 = scmp.ne.s32.totalorder %s95, %s109
      %p111 = scmp.eq.s32.totalorder %s24, 0
      %p112 = por %p110, %p111
      %s114 = sadd.s32 %s113, 1
      %p117 = scmp.eq.s32.totalorder %s18, 1
      %p118 = scmp.ne.s32.totalorder %s113, %s115
      %p119 = scmp.eq.s32.totalorder %s18, 0
      %p120 = por %p118, %p119
      %p121 = scmp.ne.s32.totalorder %s113, %s115
      %p122 = scmp.eq.s32.totalorder %s23, 1
      %p123 = por %p121, %p122
      %p124 = scmp.ne.s32.totalorder %s115, %s116
      %p125 = scmp.eq.s32.totalorder %s23, 0
      %p126 = por %p124, %p125
      %p127 = scmp.ne.s32.totalorder %s115, %s116
      %p128 = scmp.eq.s32.totalorder %s24, 1
      %p129 = por %p127, %p128
      %p131 = scmp.ne.s32.totalorder %s116, %s130
      %p132 = scmp.eq.s32.totalorder %s24, 0
      %p133 = por %p131, %p132
      %s134 = ssub.s32 %s25, %s37
      %p135 = scmp.eq.s32.totalorder %s134, 0
      %s137 = sadd.s32 %s136, 1
      %s138 = scalar_select %p135, %s136, %s137
      %p141 = pneg %p135
      %p142 = scmp.eq.s32.totalorder %s18, 1
      %p143 = por %p141, %p142
      %p144 = scmp.ne.s32.totalorder %s136, %s139
      %p145 = scmp.eq.s32.totalorder %s18, 0
      %p146 = por %p144, %p145
      %p147 = scmp.ne.s32.totalorder %s136, %s139
      %p148 = scmp.eq.s32.totalorder %s23, 1
      %p149 = por %p147, %p148
      %p150 = scmp.ne.s32.totalorder %s139, %s140
      %p151 = scmp.eq.s32.totalorder %s23, 0
      %p152 = por %p150, %p151
      %p153 = scmp.ne.s32.totalorder %s139, %s140
      %p154 = scmp.eq.s32.totalorder %s24, 1
      %p155 = por %p153, %p154
      %p157 = scmp.ne.s32.totalorder %s140, %s156
      %p158 = scmp.eq.s32.totalorder %s24, 0
      %p159 = por %p157, %p158
      %p160 = scmp.le.s32.totalorder 1, %s18
      %p161 = scmp.lt.s32.totalorder %s18, 3
      %p162 = pnand %p160, %p161
      %p163 = pneg %p162
      // Predicated region
      $region9: #{tpu_custom_call.1} parent=5 // pred_check
        _
      $region10: #{tpu_custom_call.1} parent=5 // pred_check_branch
        %165 = sbr.rel (%p162) target = $region12
      $region11: #{tpu_custom_call.1} parent=5 // pred_region
        %s166 = ssub.s32 %s18, 1
        // Predicated region
        $region13: #{tpu_custom_call.1} parent=11 // pred_check
          %p167 = pneg %p84
        $region14: #{tpu_custom_call.1} parent=11 // pred_check_branch
          %169 = sbr.rel (%p167) target = $region16
        $region15: #{tpu_custom_call.1} parent=11 // pred_region
          %s170 = smul.u32 16, %s28
          %s172 = ssub.s32 2048, 2048
          %173 = vsyncadd [#allocation7], %s172
          %s174 = smul.addr %s170, 128
          %s175 = scalar_lea.hbm %s1, %s174
          %s176 = sshll.u32 [#allocation6], 4
          %s177 = int_to_ptr.vmem [resolvable:$true] %s176
          %182 = dma.hbm_to_vmem [thread:$0]  %s175, 2048, %s177, [#allocation7], 128, 128, 8
        $region16: #{tpu_custom_call.1} parent=11 // pred_fallthru
          _
        // Predicated region
        $region17: #{tpu_custom_call.1} parent=11 // pred_check
          %p183 = pneg %p105
        $region18: #{tpu_custom_call.1} parent=11 // pred_check_branch
          %185 = sbr.rel (%p183) target = $region20
        $region19: #{tpu_custom_call.1} parent=11 // pred_region
          _
        $region20: #{tpu_custom_call.1} parent=11 // pred_fallthru
          _
        // Predicated region
        $region21: #{tpu_custom_call.1} parent=11 // pred_check
          %p186 = pneg %p126
        $region22: #{tpu_custom_call.1} parent=11 // pred_check_branch
          %188 = sbr.rel (%p186) target = $region24
        $region23: #{tpu_custom_call.1} parent=11 // pred_region
          _
        $region24: #{tpu_custom_call.1} parent=11 // pred_fallthru
          _
      $region12: #{tpu_custom_call.1} parent=5 // pred_fallthru
        _
      %p189 = scmp.lt.s32.totalorder %s18, 2
      // Predicated region
      $region25: #{tpu_custom_call.1} parent=5 // pred_check
        %p190 = pneg %p189
      $region26: #{tpu_custom_call.1} parent=5 // pred_check_branch
        %192 = sbr.rel (%p190) target = $region28
      $region27: #{tpu_custom_call.1} parent=5 // pred_region
        // Predicated region
        $region29: #{tpu_custom_call.1} parent=27 // pred_check
          %p193 = pneg %p52
        $region30: #{tpu_custom_call.1} parent=27 // pred_check_branch
          %195 = sbr.rel (%p193) target = $region32
        $region31: #{tpu_custom_call.1} parent=27 // pred_region
          %s196 = sand.u32 %s42, 1
          %s197 = scalar_lea.sflag [#allocation4], %s196
          %s198 = sand.u32 %s42, 1
          %s199 = smul.addr %s198, 8
          %s200 = scalar_lea.vmem [#allocation3], %s199
          %s202 = ssub.s32 128, 128
          %203 = vsyncadd %s197, %s202
          %s204 = sadd.s32 %s26, %s25
          %s205 = smul.addr %s204, 128
          %s206 = scalar_lea.hbm %s0, %s205
          %s208 = sshll.u32 %s200, 4
          %s209 = int_to_ptr.vmem [resolvable:$true] %s208
          %211 = dma.hbm_to_vmem [thread:$0]  %s206, 128, %s209, %s197
        $region32: #{tpu_custom_call.1} parent=27 // pred_fallthru
          _
      $region28: #{tpu_custom_call.1} parent=5 // pred_fallthru
        _
      %p212 = scmp.le.s32.totalorder 1, %s18
      %p213 = scmp.lt.s32.totalorder %s18, 3
      %p214 = pnand %p212, %p213
      %p215 = pneg %p214
      // Predicated region
      $region33: #{tpu_custom_call.1} parent=5 // pred_check
        _
      $region34: #{tpu_custom_call.1} parent=5 // pred_check_branch
        %217 = sbr.rel (%p214) target = $region36
      $region35: #{tpu_custom_call.1} parent=5 // pred_region
        %s218 = ssub.s32 %s18, 1
        %s219 = sand.u32 %s45, 1
        %s220 = scalar_lea.sflag [#allocation4], %s219
        %s221 = sand.u32 %s45, 1
        %s222 = smul.addr %s221, 8
        %s223 = scalar_lea.vmem [#allocation3], %s222
        // Predicated region
        $region37: #{tpu_custom_call.1} parent=35 // pred_check
          %p224 = pneg %p58
        $region38: #{tpu_custom_call.1} parent=35 // pred_check_branch
          %226 = sbr.rel (%p224) target = $region40
        $region39: #{tpu_custom_call.1} parent=35 // pred_region
          %227 = dma.done %s220, 128
        $region40: #{tpu_custom_call.1} parent=35 // pred_fallthru
          _
        // Predicated region
        $region41: #{tpu_custom_call.1} parent=35 // pred_check
          %p228 = pneg %p84
        $region42: #{tpu_custom_call.1} parent=35 // pred_check_branch
          %230 = sbr.rel (%p228) target = $region44
        $region43: #{tpu_custom_call.1} parent=35 // pred_region
          %231 = dma.done [#allocation7], 2048
        $region44: #{tpu_custom_call.1} parent=35 // pred_fallthru
          _
        %s232 = sand.u32 %s45, 1
        %s233 = scalar_lea.sflag [#allocation4], %s232
        %s234 = sand.u32 %s45, 1
        %s235 = smul.addr %s234, 8
        %s236 = scalar_lea.vmem [#allocation3], %s235
        %p237 = pneg %p58
        %p238 = pneg %p55
        %p239 = pneg %p84
        %p240 = pneg %p81
        %p241 = pneg %p105
        %p242 = pneg %p102
        %p243 = pneg %p126
        %p244 = pneg %p123
        %p245 = pneg %p152
        %p246 = pneg %p149
        %s247 = sand.u32 %s139, 1
        %s248 = scalar_lea.sflag [#allocation5], %s247
        %s249 = sand.u32 %s139, 1
        %s250 = smul.addr %s249, 8
        %s251 = scalar_lea.vmem [#allocation8], %s250
        %s252 = smul.u32 16, %s28
        %v253 = vld [vmem:[%s223] sm:$0xff]
        %v254 = vld [vmem:[#allocation6] sm:$0xff]
        %v255 = vld [vmem:[#allocation6 + $0x8] sm:$0xff]
        %v256 = vld [vmem:[#allocation6 + $0x10] sm:$0xff]
        %v257 = vld [vmem:[#allocation6 + $0x18] sm:$0xff]
        %v258 = vld [vmem:[#allocation6 + $0x20] sm:$0xff]
        %v259 = vld [vmem:[#allocation6 + $0x28] sm:$0xff]
        %v260 = vld [vmem:[#allocation6 + $0x30] sm:$0xff]
        %v261 = vld [vmem:[#allocation6 + $0x38] sm:$0xff]
        %v262 = vld [vmem:[#allocation6 + $0x40] sm:$0xff]
        %v263 = vld [vmem:[#allocation6 + $0x48] sm:$0xff]
        %v264 = vld [vmem:[#allocation6 + $0x50] sm:$0xff]
        %v265 = vld [vmem:[#allocation6 + $0x58] sm:$0xff]
        %v266 = vld [vmem:[#allocation6 + $0x60] sm:$0xff]
        %v267 = vld [vmem:[#allocation6 + $0x68] sm:$0xff]
        %v268 = vld [vmem:[#allocation6 + $0x70] sm:$0xff]
        %v269 = vld [vmem:[#allocation6 + $0x78] sm:$0xff]
        %270 = vmatprep.subr.mxu0 0.0
        %271 = vmatpush1.msra.mxu0 %v254
        %272 = vmatprep.subr.mxu0 0.0
        %273 = vmatpush1.msra.mxu0 %v255
        %274 = vmatprep.subr.mxu0 0.0
        %275 = vmatpush1.msra.mxu0 %v256
        %276 = vmatprep.subr.mxu0 0.0
        %277 = vmatpush1.msra.mxu0 %v257
        %278 = vmatprep.subr.mxu0 0.0
        %279 = vmatpush1.msra.mxu0 %v258
        %280 = vmatprep.subr.mxu0 0.0
        %281 = vmatpush1.msra.mxu0 %v259
        %282 = vmatprep.subr.mxu0 0.0
        %283 = vmatpush1.msra.mxu0 %v260
        %284 = vmatprep.subr.mxu0 0.0
        %285 = vmatpush1.msra.mxu0 %v261
        %286 = vmatprep.subr.mxu0 0.0
        %287 = vmatpush1.msra.mxu0 %v262
        %288 = vmatprep.subr.mxu0 0.0
        %289 = vmatpush1.msra.mxu0 %v263
        %290 = vmatprep.subr.mxu0 0.0
        %291 = vmatpush1.msra.mxu0 %v264
        %292 = vmatprep.subr.mxu0 0.0
        %293 = vmatpush1.msra.mxu0 %v265
        %294 = vmatprep.subr.mxu0 0.0
        %295 = vmatpush1.msra.mxu0 %v266
        %296 = vmatprep.subr.mxu0 0.0
        %297 = vmatpush1.msra.mxu0 %v267
        %298 = vmatprep.subr.mxu0 0.0
        %299 = vmatpush1.msra.mxu0 %v268
        %300 = vmatprep.subr.mxu0 0.0
        %301 = vmatpush1.msra.mxu0 %v269
        %302 = vmatprep.subr.mxu0 0.0
        %303 = vmatpush1.msra.mxu0 0.0
        %304 = vmatprep.subr.mxu0 0.0
        %305 = vmatpush1.msra.mxu0 0.0
        %306 = vmatprep.subr.mxu0 0.0
        %307 = vmatpush1.msra.mxu0 0.0
        %308 = vmatprep.subr.mxu0 0.0
        %309 = vmatpush1.msra.mxu0 0.0
        %310 = vmatprep.subr.mxu0 0.0
        %311 = vmatpush1.msra.mxu0 0.0
        %312 = vmatprep.subr.mxu0 0.0
        %313 = vmatpush1.msra.mxu0 0.0
        %314 = vmatprep.subr.mxu0 0.0
        %315 = vmatpush1.msra.mxu0 0.0
        %316 = vmatprep.subr.mxu0 0.0
        %317 = vmatpush1.msra.mxu0 0.0
        %318 = vmatprep.subr.mxu0 0.0
        %319 = vmatpush1.msra.mxu0 0.0
        %320 = vmatprep.subr.mxu0 0.0
        %321 = vmatpush1.msra.mxu0 0.0
        %322 = vmatprep.subr.mxu0 0.0
        %323 = vmatpush1.msra.mxu0 0.0
        %324 = vmatprep.subr.mxu0 0.0
        %325 = vmatpush1.msra.mxu0 0.0
        %326 = vmatprep.subr.mxu0 0.0
        %327 = vmatpush1.msra.mxu0 0.0
        %328 = vmatprep.subr.mxu0 0.0
        %329 = vmatpush1.msra.mxu0 0.0
        %330 = vmatprep.subr.mxu0 0.0
        %331 = vmatpush1.msra.mxu0 0.0
        %332 = vmatprep.subr.mxu0 0.0
        %333 = vmatpush1.msra.mxu0 0.0
        %334 = vmatprep.mubr.f32.mxu0 0.0
        %335 = vmatmul.mubr.f32.gmra.mrb[0].mxu0 %v253
        %v336 = vpop.f32.mrb[0].mxu0
        %v337 = vadd.f32 0.0, %v336
        %v338 = vpop.f32.mrb[0].mxu0
        %339 = vdwg.mxu0
        %v340 = vmul.f32 %v253, %v253
        %341 = vadd.xlane.f32.xlu0 %v340
        %v342 = vpop.xlane.xlu0 %341
        %v343 = vmul.f32 %v337, %v337
        %344 = vadd.xlane.f32.xlu0 %v343
        %v345 = vpop.xlane.xlu0 %344
        %v346 = vrsqrt.pop %v342
        %v347 = vmul.f32 %v342, %v346
        %vm348 = vcmp.eq.f32.partialorder %v342, inf
        %v349 = vsel %vm348, %v342, %v347
        %vm350 = vcmp.eq.f32.partialorder %v342, 0.0
        %v351 = vand.u32 %v342, 2147483648
        %v352 = vsel %vm350, %v351, %v349
        %v353 = vmax.f32 %v352, 1e-15
        %v354 = vrsqrt.pop %v345
        %v355 = vmul.f32 %v345, %v354
        %vm356 = vcmp.eq.f32.partialorder %v345, inf
        %v357 = vsel %vm356, %v345, %v355
        %vm358 = vcmp.eq.f32.partialorder %v345, 0.0
        %v359 = vand.u32 %v345, 2147483648
        %v360 = vsel %vm358, %v359, %v357
        %v361 = vmax.f32 %v360, 1e-15
        %v362 = vrcp.pop %v353
        %v363 = vmul.f32 %v361, %v362
        %v364 = vmax.f32 %v353, -1.0
        %v365 = vmin.f32 %v364, 1.0
        %v366 = vadd.f32 %v365, 1.0
        %v367 = vlog2.pop %v366
        %v368 = vmul.f32 %v367, 0.6931472
        %v369 = vmul.f32 -0.5, %v365
        %v370 = vadd.f32 %v369, 1.0
        %v371 = vmul.f32 %v370, %v365
        %v372 = vand.u32 2147483647, %v365
        %vm373 = vcmp.lt.f32.partialorder %v372, 0.0004427343
        %v374 = vsel %vm373, %v371, %v368
        %v375 = vsub.f32 0.0, %v365
        %v376 = vadd.f32 %v375, 1.0
        %v377 = vlog2.pop %v376
        %v378 = vmul.f32 %v377, 0.6931472
        %v379 = vmul.f32 -0.5, %v375
        %v380 = vadd.f32 %v379, 1.0
        %v381 = vmul.f32 %v380, %v375
        %v382 = vand.u32 2147483647, %v375
        %vm383 = vcmp.lt.f32.partialorder %v382, 0.0004427343
        %v384 = vsel %vm383, %v381, %v378
        %v385 = vsub.f32 %v374, %v384
        %v386 = vmul.f32 %v385, 0.5
        %v387 = vmul.f32 %v363, %v386
        %v388 = vtanh.pop %v387
        %v389 = vrcp.pop %v361
        %v390 = vmul.f32 %v388, %v389
        %vm391 = vcmp.eq.f32.partialorder %v345, 0.0
        %v392 = vsel %vm391, 0.0, %v390
        %v393 = vmul.f32 %v392, %v361
        %v394 = vmax.f32 %v393, 1e-15
        %vm395 = vcmp.gt.f32.partialorder %v394, 0.996
        %v396 = vrcp.pop %v394
        %v397 = vmul.f32 %v396, 0.996
        %v398 = vsel %vm395, %v397, 1.0
        %v399 = vmul.f32 %v392, %v398
        %v400 = vld [vmem:[%s2] sm:$0x1]
        %s401 = sld [smem:[#allocation2]]
        %v403 = vlaneseq
        %v404 = vshrl.u32 %v403, 7
        %v405 = vsub.s32 0, %v404
        %v406 = vrot.slane %v400, %v405
        %v408 = vmul.f32 %v337, %v406
        %409 = vadd.xlane.f32.xlu0 %v408
        %v410 = vpop.xlane.xlu0 %409
        %v411 = vmin.f32 %v394, 0.996
        %v412 = vmul.f32 %v411, %v411
        %v413 = vmul.f32 %v399, %v410
        %v414 = vmul.f32 %v413, 2.0
        %v415 = vadd.f32 %v414, 1.0
        %v416 = vstv %s401
        %v417 = vadd.f32 %v415, %v416
        %v418 = vsub.f32 1.0, %v412
        %v419 = vmul.f32 %v416, %v412
        %v420 = vadd.f32 %v415, %v419
        %v421 = vmax.f32 %v420, 1e-15
        %v422 = vrcp.pop %v421
        %v423 = vmul.f32 %v399, %v417
        %v424 = vmul.f32 %v423, %v422
        %v425 = vmul.f32 %v418, %v422
        %v426 = vmul.f32 %v424, %v424
        %v427 = vmul.f32 %v426, %v345
        %v428 = vmul.f32 %v424, %v425
        %v429 = vmul.f32 %v428, 2.0
        %v430 = vmul.f32 %v429, %v410
        %v431 = vadd.f32 %v427, %v430
        %v432 = vmul.f32 %v425, %v425
        %v433 = vmul.f32 %v432, %v416
        %v434 = vadd.f32 %v431, %v433
        %v435 = vmax.f32 %v434, 0.0
        %v436 = vrsqrt.pop %v435
        %v437 = vmul.f32 %v435, %v436
        %vm438 = vcmp.eq.f32.partialorder %v435, inf
        %v439 = vsel %vm438, %v435, %v437
        %vm440 = vcmp.eq.f32.partialorder %v435, 0.0
        %v441 = vand.u32 %v435, 2147483648
        %v442 = vsel %vm440, %v441, %v439
        %v443 = vmax.f32 %v442, 1e-15
        %vm444 = vcmp.gt.f32.partialorder %v443, 0.996
        %v445 = vrcp.pop %v443
        %v446 = vmul.f32 %v445, 0.996
        %v447 = vsel %vm444, %v446, 1.0
        %v448 = vmul.f32 %v447, %v424
        %v449 = vmul.f32 %v448, %v337
        %v450 = vmul.f32 %v447, %v425
        %v451 = vmul.f32 %v450, %v406
        %v452 = vadd.f32 %v449, %v451
        %453 = vst [vmem:[%s251] sm:$0xff] %v452
        %s454 = sand.u32 %s139, 1
        %s455 = scalar_lea.sflag [#allocation5], %s454
        %s456 = sand.u32 %s139, 1
        %s457 = smul.addr %s456, 8
        %s458 = scalar_lea.vmem [#allocation8], %s457
        // Predicated region
        $region45: #{tpu_custom_call.1} parent=35 // pred_check
          %p459 = pneg %p149
        $region46: #{tpu_custom_call.1} parent=35 // pred_check_branch
          %461 = sbr.rel (%p459) target = $region48
        $region47: #{tpu_custom_call.1} parent=35 // pred_region
          %s463 = ssub.s32 128, 128
          %464 = vsyncadd %s455, %s463
          %s465 = smul.addr %s27, 128
          %s466 = scalar_lea.hbm %s4, %s465
          %s468 = sshll.u32 %s458, 4
          %s469 = int_to_ptr.vmem [resolvable:$true] %s468
          %471 = dma.vmem_to_hbm [thread:$0]  %s469, 128, %s466, %s455
        $region48: #{tpu_custom_call.1} parent=35 // pred_fallthru
          _
      $region36: #{tpu_custom_call.1} parent=5 // pred_fallthru
        _
      %p472 = scmp.le.s32.totalorder 2, %s18
      // Predicated region
      $region49: #{tpu_custom_call.1} parent=5 // pred_check
        %p473 = pneg %p472
      $region50: #{tpu_custom_call.1} parent=5 // pred_check_branch
        %475 = sbr.rel (%p473) target = $region52
      $region51: #{tpu_custom_call.1} parent=5 // pred_region
        %s476 = ssub.s32 %s18, 2
        // Predicated region
        $region53: #{tpu_custom_call.1} parent=51 // pred_check
          %p477 = pneg %p155
        $region54: #{tpu_custom_call.1} parent=51 // pred_check_branch
          %479 = sbr.rel (%p477) target = $region56
        $region55: #{tpu_custom_call.1} parent=51 // pred_region
          %s480 = sand.u32 %s140, 1
          %s481 = scalar_lea.sflag [#allocation5], %s480
          %s482 = sand.u32 %s140, 1
          %s483 = smul.addr %s482, 8
          %s484 = scalar_lea.vmem [#allocation8], %s483
          %485 = dma.done %s481, 128
        $region56: #{tpu_custom_call.1} parent=51 // pred_fallthru
          _
      $region52: #{tpu_custom_call.1} parent=5 // pred_fallthru
        _
    $region6: #{tpu_custom_call.1} parent=1 // loop_footer
      %s22 = sadd.s32 1, %s18
    $region7: #{tpu_custom_call.1} parent=1 // loop_footer_branch
      %17 = sbr.rel target = $region3
    $region8: #{tpu_custom_call.1} parent=1 // loop_exit
      _
    %486 = vsyncpa [#allocation4], 1
    %s487 = scalar_lea.sflag [#allocation4], 1
    %488 = vsyncpa %s487, 1
    %489 = vsyncpa [#allocation7], 1
    %490 = vsyncpa [#allocation5], 1
    %s491 = scalar_lea.sflag [#allocation5], 1
    %492 = vsyncpa %s491, 1

</llo_original>
